<compile_context>
chip_gen: v6e
topology: v6e:2x2x1
jax: 0.10.0
libtpu: 0.0.40
codegen_flags: <defaults>
</compile_context>

<pallas_src>
import jax
import jax.numpy as jnp
from jax.experimental import pallas as pl
from jax.experimental.pallas import tpu as pltpu


def _vae_encoder_kernel(x_ref, w1_ref, b1_ref, wmv_ref, bmv_ref, eps_ref,
                        mu_ref, lv_ref, z_ref):
    # fc1: bf16 operands on the MXU, fp32 accumulation; bias + relu in fp32.
    x = x_ref[...].astype(jnp.bfloat16)
    h1 = jnp.dot(x, w1_ref[...], preferred_element_type=jnp.float32)
    h1 = jnp.maximum(h1 + b1_ref[...].astype(jnp.float32), 0.0)

    # fused fc_mu / fc_var: one (tb, D) x (D, 2D) matmul instead of two.
    mv = jnp.dot(h1.astype(jnp.bfloat16), wmv_ref[...],
                 preferred_element_type=jnp.float32)
    mv = mv + bmv_ref[...].astype(jnp.float32)
    d = mv.shape[-1] // 2
    mu = mv[:, :d]
    lv = mv[:, d:]

    # reparameterize: z = eps * exp(0.5 * log_var) + mu
    std = jnp.exp(0.5 * lv)
    z = eps_ref[...].astype(jnp.float32) * std + mu

    mu_ref[...] = mu.astype(mu_ref.dtype)
    lv_ref[...] = lv.astype(lv_ref.dtype)
    z_ref[...] = z.astype(z_ref.dtype)


def _pick_block_batch(batch):
    """Largest MXU-friendly tile that still gives >= 2 grid steps when possible."""
    for cand in (512, 256, 128, 64, 32, 16, 8):
        if batch % cand == 0 and cand <= max(batch // 2, 8):
            return cand
    return batch


def vae_encoder_forward(x, params, eps, *, block_batch=None):
    """x, eps: (B, D) float32. params: bf16 weights pre-transposed to (in, out),
    with fc_mu/fc_var packed as w_muvar (D, 2D) / b_muvar (1, 2D)."""
    B, D = x.shape
    w1, b1 = params["w1"], params["b1"]
    wmv, bmv = params["w_muvar"], params["b_muvar"]

    tb = _pick_block_batch(B) if block_batch is None else block_batch
    assert B % tb == 0, "pad batch to a multiple of the block size (8 fp32 / 16 bf16)"
    grid = (B // tb,)

    act_spec = pl.BlockSpec((tb, D), lambda i: (i, 0))
    # Constant index_map -> fetched once; single-buffer to halve weight VMEM residency.
    w1_spec = pl.BlockSpec((D, D), lambda i: (0, 0), pipeline_mode=pl.Buffered(1))
    b1_spec = pl.BlockSpec((1, D), lambda i: (0, 0), pipeline_mode=pl.Buffered(1))
    wmv_spec = pl.BlockSpec((D, 2 * D), lambda i: (0, 0), pipeline_mode=pl.Buffered(1))
    bmv_spec = pl.BlockSpec((1, 2 * D), lambda i: (0, 0), pipeline_mode=pl.Buffered(1))

    # Explicit VMEM budget: resident weights + 2x-buffered activation tiles
    # + headroom for fp32 intermediates (h1, mu|logvar slab).
    wgt_bytes = (w1.size * w1.dtype.itemsize + wmv.size * wmv.dtype.itemsize
                 + b1.size * b1.dtype.itemsize + bmv.size * bmv.dtype.itemsize)
    io_tile_bytes = tb * D * (x.dtype.itemsize + eps.dtype.itemsize + 3 * 4)
    vmem_bytes = int(wgt_bytes + 2 * io_tile_bytes + 3 * tb * 2 * D * 4 + (4 << 20))
    vmem_bytes = max(16 << 20, min(vmem_bytes, 100 << 20))
    # TODO(synk): for embed_dim large enough that the (D, 2D) weight no longer fits VMEM
    # (v7x: 64 MiB physical), add a K/N weight-tiling grid axis with an fp32 accumulator.

    out_shape = jax.ShapeDtypeStruct((B, D), jnp.float32)

    return pl.pallas_call(
        _vae_encoder_kernel,
        out_shape=(out_shape, out_shape, out_shape),
        grid_spec=pltpu.PrefetchScalarGridSpec(
            num_scalar_prefetch=0,
            grid=grid,
            in_specs=[act_spec,            # x
                      w1_spec, b1_spec,    # fc1
                      wmv_spec, bmv_spec,  # fc_mu | fc_var (fused)
                      act_spec],           # eps
            out_specs=[act_spec, act_spec, act_spec],
        ),
        compiler_params=pltpu.CompilerParams(
            dimension_semantics=("parallel",),
            vmem_limit_bytes=vmem_bytes),
    )(x, w1, b1, wmv, bmv, eps)


def init_params(key, embed_dim, dtype=jnp.bfloat16):
    """Synthetic PyTorch-style Linear params, pre-transposed to (in, out) = W_pt.T,
    stored bf16, with fc_mu/fc_var concatenated along the output axis."""
    ks = jax.random.split(key, 6)
    scale = 1.0 / jnp.sqrt(jnp.float32(embed_dim))

    def w(k):
        return (jax.random.uniform(k, (embed_dim, embed_dim), jnp.float32, -1.0, 1.0)
                * scale).astype(dtype)

    def b(k):
        return (jax.random.uniform(k, (1, embed_dim), jnp.float32, -1.0, 1.0)
                * scale).astype(dtype)

    w_mu, b_mu = w(ks[2]), b(ks[3])
    w_var, b_var = w(ks[4]), b(ks[5])
    return {
        "w1": w(ks[0]), "b1": b(ks[1]),
        "w_muvar": jnp.concatenate([w_mu, w_var], axis=1),
        "b_muvar": jnp.concatenate([b_mu, b_var], axis=1),
    }


def _reference(x, params, eps):
    """fp32 reference using the (upcast) bf16 params."""
    w1 = params["w1"].astype(jnp.float32)
    b1 = params["b1"].astype(jnp.float32)
    wmv = params["w_muvar"].astype(jnp.float32)
    bmv = params["b_muvar"].astype(jnp.float32)
    h1 = jnp.maximum(x @ w1 + b1, 0.0)
    mv = h1 @ wmv + bmv
    d = x.shape[-1]
    mu, lv = mv[:, :d], mv[:, d:]
    z = eps * jnp.exp(0.5 * lv) + mu
    return mu, lv, z


if __name__ == "__main__":
    B, D = 256, 256  # batch, embed_dim (MXU-aligned; grid = 2 steps of 128 rows)
    key = jax.random.PRNGKey(0)
    k_x, k_p, k_eps = jax.random.split(key, 3)

    x = jax.random.normal(k_x, (B, D), jnp.float32)
    params = init_params(k_p, D)
    eps = jax.random.normal(k_eps, (B, D), jnp.float32)  # torch.randn_like(std)

    mu, log_var, z = jax.jit(vae_encoder_forward)(x, params, eps)
    jax.block_until_ready((mu, log_var, z))

    mu_r, lv_r, z_r = _reference(x, params, eps)
    # bf16 operand rounding inside the kernel -> loosened tolerances vs fp32 reference.
    assert jnp.allclose(mu, mu_r, atol=3e-2, rtol=3e-2)
    assert jnp.allclose(log_var, lv_r, atol=3e-2, rtol=3e-2)
    assert jnp.allclose(z, z_r, atol=5e-2, rtol=5e-2)

    print("KERNEL_OK")
</pallas_src>

<mosaic_0001>
module attributes {stable_mosaic.version = 11 : i64} {
  func.func @_vae_encoder_kernel(%arg0: i32, %arg1: memref<128x256xf32, #tpu.memory_space<vmem>>, %arg2: memref<256x256xbf16, #tpu.memory_space<vmem>>, %arg3: memref<1x256xbf16, #tpu.memory_space<vmem>>, %arg4: memref<256x512xbf16, #tpu.memory_space<vmem>>, %arg5: memref<1x512xbf16, #tpu.memory_space<vmem>>, %arg6: memref<128x256xf32, #tpu.memory_space<vmem>>, %arg7: memref<128x256xf32, #tpu.memory_space<vmem>>, %arg8: memref<128x256xf32, #tpu.memory_space<vmem>>, %arg9: memref<128x256xf32, #tpu.memory_space<vmem>>) attributes {dimension_semantics = [#tpu.dimension_semantics<parallel>], iteration_bounds = array<i64: 2>, scalar_prefetch = 0 : i64, scratch_operands = 0 : i64, tpu.core_type = #tpu.core_type<tc>, window_params = [{transform_indices = @transform_0, window_bounds = array<i64: 128, 256>}, {pipeline_mode = #tpu.pipeline_mode<synchronous>, transform_indices = @transform_1, window_bounds = array<i64: 256, 256>}, {pipeline_mode = #tpu.pipeline_mode<synchronous>, transform_indices = @transform_2, window_bounds = array<i64: 1, 256>}, {pipeline_mode = #tpu.pipeline_mode<synchronous>, transform_indices = @transform_3, window_bounds = array<i64: 256, 512>}, {pipeline_mode = #tpu.pipeline_mode<synchronous>, transform_indices = @transform_4, window_bounds = array<i64: 1, 512>}, {transform_indices = @transform_5, window_bounds = array<i64: 128, 256>}, {transform_indices = @transform_6, window_bounds = array<i64: 128, 256>}, {transform_indices = @transform_7, window_bounds = array<i64: 128, 256>}, {transform_indices = @transform_8, window_bounds = array<i64: 128, 256>}]} {
    %c0 = arith.constant 0 : index
    %c0_0 = arith.constant 0 : index
    %0 = vector.load %arg1[%c0, %c0_0] : memref<128x256xf32, #tpu.memory_space<vmem>>, vector<128x256xf32>
    %1 = arith.truncf %0 : vector<128x256xf32> to vector<128x256xbf16>
    %c0_1 = arith.constant 0 : index
    %c0_2 = arith.constant 0 : index
    %2 = vector.load %arg2[%c0_1, %c0_2] : memref<256x256xbf16, #tpu.memory_space<vmem>>, vector<256x256xbf16>
    %cst = arith.constant dense<0.000000e+00> : vector<128x256xf32>
    %3 = tpu.matmul %1, %2, %cst {dimension_numbers = #tpu.dot_dimension_numbers<[1], [0], [0], [1], [0, 0, 1, 1], [], []>} : vector<128x256xbf16>, vector<256x256xbf16>, vector<128x256xf32> -> vector<128x256xf32>
    %c0_3 = arith.constant 0 : index
    %c0_4 = arith.constant 0 : index
    %4 = vector.load %arg3[%c0_3, %c0_4] : memref<1x256xbf16, #tpu.memory_space<vmem>>, vector<1x256xbf16>
    %5 = arith.extf %4 : vector<1x256xbf16> to vector<1x256xf32>
    %6 = vector.broadcast %5 : vector<1x256xf32> to vector<128x256xf32>
    %7 = arith.addf %3, %6 : vector<128x256xf32>
    %cst_5 = arith.constant 0.000000e+00 : f32
    %8 = vector.broadcast %cst_5 : f32 to vector<128x256xf32>
    %9 = arith.maximumf %7, %8 : vector<128x256xf32>
    %10 = arith.truncf %9 : vector<128x256xf32> to vector<128x256xbf16>
    %c0_6 = arith.constant 0 : index
    %c0_7 = arith.constant 0 : index
    %11 = vector.load %arg4[%c0_6, %c0_7] : memref<256x512xbf16, #tpu.memory_space<vmem>>, vector<256x512xbf16>
    %cst_8 = arith.constant dense<0.000000e+00> : vector<128x512xf32>
    %12 = tpu.matmul %10, %11, %cst_8 {dimension_numbers = #tpu.dot_dimension_numbers<[1], [0], [0], [1], [0, 0, 1, 1], [], []>} : vector<128x256xbf16>, vector<256x512xbf16>, vector<128x512xf32> -> vector<128x512xf32>
    %c0_9 = arith.constant 0 : index
    %c0_10 = arith.constant 0 : index
    %13 = vector.load %arg5[%c0_9, %c0_10] : memref<1x512xbf16, #tpu.memory_space<vmem>>, vector<1x512xbf16>
    %14 = arith.extf %13 : vector<1x512xbf16> to vector<1x512xf32>
    %15 = vector.broadcast %14 : vector<1x512xf32> to vector<128x512xf32>
    %16 = arith.addf %12, %15 : vector<128x512xf32>
    %17 = vector.extract_strided_slice %16 {offsets = [0, 0], sizes = [128, 256], strides = [1, 1]} : vector<128x512xf32> to vector<128x256xf32>
    %18 = vector.extract_strided_slice %16 {offsets = [0, 256], sizes = [128, 256], strides = [1, 1]} : vector<128x512xf32> to vector<128x256xf32>
    %cst_11 = arith.constant 5.000000e-01 : f32
    %19 = vector.broadcast %cst_11 : f32 to vector<128x256xf32>
    %20 = arith.mulf %19, %18 : vector<128x256xf32>
    %21 = math.exp %20 : vector<128x256xf32>
    %c0_12 = arith.constant 0 : index
    %c0_13 = arith.constant 0 : index
    %22 = vector.load %arg6[%c0_12, %c0_13] : memref<128x256xf32, #tpu.memory_space<vmem>>, vector<128x256xf32>
    %23 = arith.mulf %22, %21 : vector<128x256xf32>
    %24 = arith.addf %23, %17 : vector<128x256xf32>
    %c0_14 = arith.constant 0 : index
    %c0_15 = arith.constant 0 : index
    %25 = vector.load %arg7[%c0_14, %c0_15] : memref<128x256xf32, #tpu.memory_space<vmem>>, vector<128x256xf32>
    tpu.vector_store %arg7[%c0_14, %c0_15], %17 {strides = array<i32>} : memref<128x256xf32, #tpu.memory_space<vmem>>, vector<128x256xf32>,
    %c0_16 = arith.constant 0 : index
    %c0_17 = arith.constant 0 : index
    %26 = vector.load %arg8[%c0_16, %c0_17] : memref<128x256xf32, #tpu.memory_space<vmem>>, vector<128x256xf32>
    tpu.vector_store %arg8[%c0_16, %c0_17], %18 {strides = array<i32>} : memref<128x256xf32, #tpu.memory_space<vmem>>, vector<128x256xf32>,
    %c0_18 = arith.constant 0 : index
    %c0_19 = arith.constant 0 : index
    %27 = vector.load %arg9[%c0_18, %c0_19] : memref<128x256xf32, #tpu.memory_space<vmem>>, vector<128x256xf32>
    tpu.vector_store %arg9[%c0_18, %c0_19], %24 {strides = array<i32>} : memref<128x256xf32, #tpu.memory_space<vmem>>, vector<128x256xf32>,
    return
  }
  func.func @transform_0(%arg0: i32) -> (i32, i32) {
    %c0_i32 = arith.constant 0 : i32
    %c0_i32_0 = arith.constant 0 : i32
    return %arg0, %c0_i32 : i32, i32
  }
  func.func @transform_1(%arg0: i32) -> (i32, i32) {
    %c0_i32 = arith.constant 0 : i32
    %c0_i32_0 = arith.constant 0 : i32
    %c0_i32_1 = arith.constant 0 : i32
    return %c0_i32, %c0_i32_0 : i32, i32
  }
  func.func @transform_2(%arg0: i32) -> (i32, i32) {
    %c0_i32 = arith.constant 0 : i32
    %c0_i32_0 = arith.constant 0 : i32
    %c0_i32_1 = arith.constant 0 : i32
    return %c0_i32, %c0_i32_0 : i32, i32
  }
  func.func @transform_3(%arg0: i32) -> (i32, i32) {
    %c0_i32 = arith.constant 0 : i32
    %c0_i32_0 = arith.constant 0 : i32
    %c0_i32_1 = arith.constant 0 : i32
    return %c0_i32, %c0_i32_0 : i32, i32
  }
  func.func @transform_4(%arg0: i32) -> (i32, i32) {
    %c0_i32 = arith.constant 0 : i32
    %c0_i32_0 = arith.constant 0 : i32
    %c0_i32_1 = arith.constant 0 : i32
    return %c0_i32, %c0_i32_0 : i32, i32
  }
  func.func @transform_5(%arg0: i32) -> (i32, i32) {
    %c0_i32 = arith.constant 0 : i32
    %c0_i32_0 = arith.constant 0 : i32
    return %arg0, %c0_i32 : i32, i32
  }
  func.func @transform_6(%arg0: i32) -> (i32, i32) {
    %c0_i32 = arith.constant 0 : i32
    %c0_i32_0 = arith.constant 0 : i32
    return %arg0, %c0_i32 : i32, i32
  }
  func.func @transform_7(%arg0: i32) -> (i32, i32) {
    %c0_i32 = arith.constant 0 : i32
    %c0_i32_0 = arith.constant 0 : i32
    return %arg0, %c0_i32 : i32, i32
  }
  func.func @transform_8(%arg0: i32) -> (i32, i32) {
    %c0_i32 = arith.constant 0 : i32
    %c0_i32_0 = arith.constant 0 : i32
    return %arg0, %c0_i32 : i32, i32
  }
}

</mosaic_0001>

<llo_original>
// kernel: vae_encoder_forward.1
$region0: #{vae_encoder_forward.1}
  #allocation0 [shape = 'u32[]', space=smem, size = 0x4, offset = 0x4, fixed_abs, tag = 'smem constant byte address 0x4 - core index']
  #allocation1 [shape = 'u32[144,128]{1,0:T(1,128)}', space=vmem, size = 0x12000, scoped, tag = 'internal scratch']
  %s0 = inlined_call_operand.hbm [shape: f32[256,256], index: 0, kind: input, shape index: {}]
  %s1 = inlined_call_operand.hbm [shape: bf16[256,256], index: 1, kind: input, shape index: {}]
  %s2 = inlined_call_operand.hbm [shape: bf16[1,256], index: 2, kind: input, shape index: {}]
  %s3 = inlined_call_operand.hbm [shape: bf16[256,512], index: 3, kind: input, shape index: {}]
  %s4 = inlined_call_operand.hbm [shape: bf16[1,512], index: 4, kind: input, shape index: {}]
  %s5 = inlined_call_operand.hbm [shape: f32[256,256], index: 5, kind: input, shape index: {}]
  %s6 = inlined_call_operand.hbm [shape: f32[256,256], index: 6, kind: output, shape index: {0}]
  %s7 = inlined_call_operand.hbm [shape: f32[256,256], index: 7, kind: output, shape index: {1}]
  %s8 = inlined_call_operand.hbm [shape: f32[256,256], index: 8, kind: output, shape index: {2}]
  %9 = xla_tuple %s6, %s7, %s8
  %s10 = sld [smem:[#allocation0]]
  $region97: #{vae_encoder_forward.1} parent=0
    _
  %s12 = ssub.s32 1, %s10
  %s13 = scalar_select 0, %s12, %s10
  $region1: #{vae_encoder_forward.1} parent=0
    #allocation2 [shape = 'u8[262144]{0}', space=vmem, size = 0x40000, scoped, tag = 'input window, operand 0']
    #allocation3 [shape = 's32[2]{0}', space=sflag, size = 0x8, scoped, tag = 'scoped memory for vae_encoder_forward.1']
    #allocation4 [shape = 's32[2]{0}', space=sflag, size = 0x8, scoped, tag = 'scoped memory for vae_encoder_forward.1']
    #allocation5 [shape = 'u8[131072]{0}', space=vmem, size = 0x20000, scoped, tag = 'input window, operand 1, single buffered']
    #allocation6 [shape = 's32[1]{0}', space=sflag, size = 0x4, scoped, tag = 'scoped memory for vae_encoder_forward.1']
    #allocation7 [shape = 'u8[1024]{0}', space=vmem, size = 0x400, scoped, tag = 'input window, operand 2, single buffered']
    #allocation8 [shape = 'u8[262144]{0}', space=vmem, size = 0x40000, scoped, tag = 'input window, operand 3, single buffered']
    #allocation9 [shape = 's32[1]{0}', space=sflag, size = 0x4, scoped, tag = 'scoped memory for vae_encoder_forward.1']
    #allocation10 [shape = 'u8[2048]{0}', space=vmem, size = 0x800, scoped, tag = 'input window, operand 4, single buffered']
    #allocation11 [shape = 'u8[262144]{0}', space=vmem, size = 0x40000, scoped, tag = 'input window, operand 5']
    #allocation12 [shape = 's32[2]{0}', space=sflag, size = 0x8, scoped, tag = 'scoped memory for vae_encoder_forward.1']
    #allocation13 [shape = 'u8[262144]{0}', space=vmem, size = 0x40000, scoped, tag = 'output window, operand 0']
    #allocation14 [shape = 'u8[262144]{0}', space=vmem, size = 0x40000, scoped, tag = 'output window, operand 1']
    #allocation15 [shape = 's32[2]{0}', space=sflag, size = 0x8, scoped, tag = 'scoped memory for vae_encoder_forward.1']
    #allocation16 [shape = 'u8[262144]{0}', space=vmem, size = 0x40000, scoped, tag = 'output window, operand 2']
    %14 = vsyncpa [#allocation3], 0
    %s15 = scalar_lea.sflag [#allocation3], 1
    %16 = vsyncpa %s15, 0
    %17 = vsyncpa [#allocation6], 0
    %18 = vsyncpa [#allocation9], 0
    %19 = vsyncpa [#allocation12], 0
    %s20 = scalar_lea.sflag [#allocation12], 1
    %21 = vsyncpa %s20, 0
    %22 = vsyncpa [#allocation4], 0
    %s23 = scalar_lea.sflag [#allocation4], 1
    %24 = vsyncpa %s23, 0
    %25 = vsyncpa [#allocation15], 0
    %s26 = scalar_lea.sflag [#allocation15], 1
    %27 = vsyncpa %s26, 0
    loop: start=0, step=1, limit=4
    $region2: #{vae_encoder_forward.1} parent=1 // loop_pre_header
      _
    $region3: #{vae_encoder_forward.1} parent=1 // loop_header
      %s29 = sphi 0, %s33
      %p30 = scmp.ge.s32.totalorder %s29, 4
      %s39 = sphi 0, %s41
      %s42 = sphi 0, %s39
      %s43 = sphi 0, %s42
      %s59 = sphi 0, %s43
      %s63 = sphi 0, %s63
      %s65 = sphi 0, %s63
      %s66 = sphi 0, %s65
      %s80 = sphi 0, %s66
      %s84 = sphi 0, %s84
      %s86 = sphi 0, %s84
      %s87 = sphi 0, %s86
      %s101 = sphi 0, %s87
      %s105 = sphi 0, %s105
      %s107 = sphi 0, %s105
      %s108 = sphi 0, %s107
      %s122 = sphi 0, %s108
      %s126 = sphi 0, %s126
      %s128 = sphi 0, %s126
      %s129 = sphi 0, %s128
      %s143 = sphi 0, %s129
      %s149 = sphi 0, %s151
      %s152 = sphi 0, %s149
      %s153 = sphi 0, %s152
      %s169 = sphi 0, %s153
      %s175 = sphi 0, %s177
      %s178 = sphi 0, %s175
      %s179 = sphi 0, %s178
      %s195 = sphi 0, %s179
      %s201 = sphi 0, %s203
      %s204 = sphi 0, %s201
      %s205 = sphi 0, %s204
      %s221 = sphi 0, %s205
      %s227 = sphi 0, %s229
      %s230 = sphi 0, %s227
      %s231 = sphi 0, %s230
      %s247 = sphi 0, %s231
    $region4: #{vae_encoder_forward.1} parent=1 // loop_header_branch
      %32 = sbr.rel (%p30) target = $region8
    $region5: #{vae_encoder_forward.1} parent=1 // loop_body
      %s34 = ssub.s32 %s29, 1
      %s35 = ssub.s32 %s29, 2
      %s36 = sadd.s32 %s29, 1
      %s37 = ssub.s32 %s29, %s36
      %p38 = scmp.eq.s32.totalorder %s37, 0
      %s40 = sadd.s32 %s39, 1
      %s41 = scalar_select %p38, %s39, %s40
      %p44 = pneg %p38
      %p45 = scmp.eq.s32.totalorder %s29, 1
      %p46 = por %p44, %p45
      %p47 = scmp.ne.s32.totalorder %s39, %s42
      %p48 = scmp.eq.s32.totalorder %s29, 0
      %p49 = por %p47, %p48
      %p50 = scmp.ne.s32.totalorder %s39, %s42
      %p51 = scmp.eq.s32.totalorder %s34, 1
      %p52 = por %p50, %p51
      %p53 = scmp.ne.s32.totalorder %s42, %s43
      %p54 = scmp.eq.s32.totalorder %s34, 0
      %p55 = por %p53, %p54
      %p56 = scmp.ne.s32.totalorder %s42, %s43
      %p57 = scmp.eq.s32.totalorder %s35, 1
      %p58 = por %p56, %p57
      %p60 = scmp.ne.s32.totalorder %s43, %s59
      %p61 = scmp.eq.s32.totalorder %s35, 0
      %p62 = por %p60, %p61
      %s64 = sadd.s32 %s63, 1
      %p67 = scmp.eq.s32.totalorder %s29, 1
      %p68 = scmp.ne.s32.totalorder %s63, %s65
      %p69 = scmp.eq.s32.totalorder %s29, 0
      %p70 = por %p68, %p69
      %p71 = scmp.ne.s32.totalorder %s63, %s65
      %p72 = scmp.eq.s32.totalorder %s34, 1
      %p73 = por %p71, %p72
      %p74 = scmp.ne.s32.totalorder %s65, %s66
      %p75 = scmp.eq.s32.totalorder %s34, 0
      %p76 = por %p74, %p75
      %p77 = scmp.ne.s32.totalorder %s65, %s66
      %p78 = scmp.eq.s32.totalorder %s35, 1
      %p79 = por %p77, %p78
      %p81 = scmp.ne.s32.totalorder %s66, %s80
      %p82 = scmp.eq.s32.totalorder %s35, 0
      %p83 = por %p81, %p82
      %s85 = sadd.s32 %s84, 1
      %p88 = scmp.eq.s32.totalorder %s29, 1
      %p89 = scmp.ne.s32.totalorder %s84, %s86
      %p90 = scmp.eq.s32.totalorder %s29, 0
      %p91 = por %p89, %p90
      %p92 = scmp.ne.s32.totalorder %s84, %s86
      %p93 = scmp.eq.s32.totalorder %s34, 1
      %p94 = por %p92, %p93
      %p95 = scmp.ne.s32.totalorder %s86, %s87
      %p96 = scmp.eq.s32.totalorder %s34, 0
      %p97 = por %p95, %p96
      %p98 = scmp.ne.s32.totalorder %s86, %s87
      %p99 = scmp.eq.s32.totalorder %s35, 1
      %p100 = por %p98, %p99
      %p102 = scmp.ne.s32.totalorder %s87, %s101
      %p103 = scmp.eq.s32.totalorder %s35, 0
      %p104 = por %p102, %p103
      %s106 = sadd.s32 %s105, 1
      %p109 = scmp.eq.s32.totalorder %s29, 1
      %p110 = scmp.ne.s32.totalorder %s105, %s107
      %p111 = scmp.eq.s32.totalorder %s29, 0
      %p112 = por %p110, %p111
      %p113 = scmp.ne.s32.totalorder %s105, %s107
      %p114 = scmp.eq.s32.totalorder %s34, 1
      %p115 = por %p113, %p114
      %p116 = scmp.ne.s32.totalorder %s107, %s108
      %p117 = scmp.eq.s32.totalorder %s34, 0
      %p118 = por %p116, %p117
      %p119 = scmp.ne.s32.totalorder %s107, %s108
      %p120 = scmp.eq.s32.totalorder %s35, 1
      %p121 = por %p119, %p120
      %p123 = scmp.ne.s32.totalorder %s108, %s122
      %p124 = scmp.eq.s32.totalorder %s35, 0
      %p125 = por %p123, %p124
      %s127 = sadd.s32 %s126, 1
      %p130 = scmp.eq.s32.totalorder %s29, 1
      %p131 = scmp.ne.s32.totalorder %s126, %s128
      %p132 = scmp.eq.s32.totalorder %s29, 0
      %p133 = por %p131, %p132
      %p134 = scmp.ne.s32.totalorder %s126, %s128
      %p135 = scmp.eq.s32.totalorder %s34, 1
      %p136 = por %p134, %p135
      %p137 = scmp.ne.s32.totalorder %s128, %s129
      %p138 = scmp.eq.s32.totalorder %s34, 0
      %p139 = por %p137, %p138
      %p140 = scmp.ne.s32.totalorder %s128, %s129
      %p141 = scmp.eq.s32.totalorder %s35, 1
      %p142 = por %p140, %p141
      %p144 = scmp.ne.s32.totalorder %s129, %s143
      %p145 = scmp.eq.s32.totalorder %s35, 0
      %p146 = por %p144, %p145
      %s147 = ssub.s32 %s29, %s36
      %p148 = scmp.eq.s32.totalorder %s147, 0
      %s150 = sadd.s32 %s149, 1
      %s151 = scalar_select %p148, %s149, %s150
      %p154 = pneg %p148
      %p155 = scmp.eq.s32.totalorder %s29, 1
      %p156 = por %p154, %p155
      %p157 = scmp.ne.s32.totalorder %s149, %s152
      %p158 = scmp.eq.s32.totalorder %s29, 0
      %p159 = por %p157, %p158
      %p160 = scmp.ne.s32.totalorder %s149, %s152
      %p161 = scmp.eq.s32.totalorder %s34, 1
      %p162 = por %p160, %p161
      %p163 = scmp.ne.s32.totalorder %s152, %s153
      %p164 = scmp.eq.s32.totalorder %s34, 0
      %p165 = por %p163, %p164
      %p166 = scmp.ne.s32.totalorder %s152, %s153
      %p167 = scmp.eq.s32.totalorder %s35, 1
      %p168 = por %p166, %p167
      %p170 = scmp.ne.s32.totalorder %s153, %s169
      %p171 = scmp.eq.s32.totalorder %s35, 0
      %p172 = por %p170, %p171
      %s173 = ssub.s32 %s29, %s36
      %p174 = scmp.eq.s32.totalorder %s173, 0
      %s176 = sadd.s32 %s175, 1
      %s177 = scalar_select %p174, %s175, %s176
      %p180 = pneg %p174
      %p181 = scmp.eq.s32.totalorder %s29, 1
      %p182 = por %p180, %p181
      %p183 = scmp.ne.s32.totalorder %s175, %s178
      %p184 = scmp.eq.s32.totalorder %s29, 0
      %p185 = por %p183, %p184
      %p186 = scmp.ne.s32.totalorder %s175, %s178
      %p187 = scmp.eq.s32.totalorder %s34, 1
      %p188 = por %p186, %p187
      %p189 = scmp.ne.s32.totalorder %s178, %s179
      %p190 = scmp.eq.s32.totalorder %s34, 0
      %p191 = por %p189, %p190
      %p192 = scmp.ne.s32.totalorder %s178, %s179
      %p193 = scmp.eq.s32.totalorder %s35, 1
      %p194 = por %p192, %p193
      %p196 = scmp.ne.s32.totalorder %s179, %s195
      %p197 = scmp.eq.s32.totalorder %s35, 0
      %p198 = por %p196, %p197
      %s199 = ssub.s32 %s29, %s36
      %p200 = scmp.eq.s32.totalorder %s199, 0
      %s202 = sadd.s32 %s201, 1
      %s203 = scalar_select %p200, %s201, %s202
      %p206 = pneg %p200
      %p207 = scmp.eq.s32.totalorder %s29, 1
      %p208 = por %p206, %p207
      %p209 = scmp.ne.s32.totalorder %s201, %s204
      %p210 = scmp.eq.s32.totalorder %s29, 0
      %p211 = por %p209, %p210
      %p212 = scmp.ne.s32.totalorder %s201, %s204
      %p213 = scmp.eq.s32.totalorder %s34, 1
      %p214 = por %p212, %p213
      %p215 = scmp.ne.s32.totalorder %s204, %s205
      %p216 = scmp.eq.s32.totalorder %s34, 0
      %p217 = por %p215, %p216
      %p218 = scmp.ne.s32.totalorder %s204, %s205
      %p219 = scmp.eq.s32.totalorder %s35, 1
      %p220 = por %p218, %p219
      %p222 = scmp.ne.s32.totalorder %s205, %s221
      %p223 = scmp.eq.s32.totalorder %s35, 0
      %p224 = por %p222, %p223
      %s225 = ssub.s32 %s29, %s36
      %p226 = scmp.eq.s32.totalorder %s225, 0
      %s228 = sadd.s32 %s227, 1
      %s229 = scalar_select %p226, %s227, %s228
      %p232 = pneg %p226
      %p233 = scmp.eq.s32.totalorder %s29, 1
      %p234 = por %p232, %p233
      %p235 = scmp.ne.s32.totalorder %s227, %s230
      %p236 = scmp.eq.s32.totalorder %s29, 0
      %p237 = por %p235, %p236
      %p238 = scmp.ne.s32.totalorder %s227, %s230
      %p239 = scmp.eq.s32.totalorder %s34, 1
      %p240 = por %p238, %p239
      %p241 = scmp.ne.s32.totalorder %s230, %s231
      %p242 = scmp.eq.s32.totalorder %s34, 0
      %p243 = por %p241, %p242
      %p244 = scmp.ne.s32.totalorder %s230, %s231
      %p245 = scmp.eq.s32.totalorder %s35, 1
      %p246 = por %p244, %p245
      %p248 = scmp.ne.s32.totalorder %s231, %s247
      %p249 = scmp.eq.s32.totalorder %s35, 0
      %p250 = por %p248, %p249
      %p251 = scmp.le.s32.totalorder 1, %s29
      %p252 = scmp.lt.s32.totalorder %s29, 3
      %p253 = pnand %p251, %p252
      %p254 = pneg %p253
      // Predicated region
      $region9: #{vae_encoder_forward.1} parent=5 // pred_check
        _
      $region10: #{vae_encoder_forward.1} parent=5 // pred_check_branch
        %256 = sbr.rel (%p253) target = $region12
      $region11: #{vae_encoder_forward.1} parent=5 // pred_region
        %s257 = ssub.s32 %s29, 1
        // Predicated region
        $region13: #{vae_encoder_forward.1} parent=11 // pred_check
          %p258 = pneg %p76
        $region14: #{vae_encoder_forward.1} parent=11 // pred_check_branch
          %260 = sbr.rel (%p258) target = $region16
        $region15: #{vae_encoder_forward.1} parent=11 // pred_region
          %s262 = ssub.s32 4096, 4096
          %263 = vsyncadd [#allocation6], %s262
          %s264 = sshll.u32 [#allocation5], 4
          %s265 = int_to_ptr.vmem [resolvable:$true] %s264
          %270 = dma.hbm_to_vmem [thread:$0]  %s1, 4096, %s265, [#allocation6], 128, 128, 8
        $region16: #{vae_encoder_forward.1} parent=11 // pred_fallthru
          _
        // Predicated region
        $region17: #{vae_encoder_forward.1} parent=11 // pred_check
          %p271 = pneg %p97
        $region18: #{vae_encoder_forward.1} parent=11 // pred_check_branch
          %273 = sbr.rel (%p271) target = $region20
        $region19: #{vae_encoder_forward.1} parent=11 // pred_region
          %s275 = ssub.s32 32, 32
          %276 = vsyncadd [#allocation6], %s275
          %s278 = sshll.u32 [#allocation7], 4
          %s279 = int_to_ptr.vmem [resolvable:$true] %s278
          %281 = dma.hbm_to_vmem [thread:$0]  %s2, 32, %s279, [#allocation6]
        $region20: #{vae_encoder_forward.1} parent=11 // pred_fallthru
          _
        // Predicated region
        $region21: #{vae_encoder_forward.1} parent=11 // pred_check
          %p282 = pneg %p118
        $region22: #{vae_encoder_forward.1} parent=11 // pred_check_branch
          %284 = sbr.rel (%p282) target = $region24
        $region23: #{vae_encoder_forward.1} parent=11 // pred_region
          %s286 = ssub.s32 8192, 8192
          %287 = vsyncadd [#allocation9], %s286
          %s288 = sshll.u32 [#allocation8], 4
          %s289 = int_to_ptr.vmem [resolvable:$true] %s288
          %294 = dma.hbm_to_vmem [thread:$0]  %s3, 8192, %s289, [#allocation9], 256, 256, 16
        $region24: #{vae_encoder_forward.1} parent=11 // pred_fallthru
          _
        // Predicated region
        $region25: #{vae_encoder_forward.1} parent=11 // pred_check
          %p295 = pneg %p139
        $region26: #{vae_encoder_forward.1} parent=11 // pred_check_branch
          %297 = sbr.rel (%p295) target = $region28
        $region27: #{vae_encoder_forward.1} parent=11 // pred_region
          %s299 = ssub.s32 64, 64
          %300 = vsyncadd [#allocation9], %s299
          %s302 = sshll.u32 [#allocation10], 4
          %s303 = int_to_ptr.vmem [resolvable:$true] %s302
          %305 = dma.hbm_to_vmem [thread:$0]  %s4, 64, %s303, [#allocation9]
        $region28: #{vae_encoder_forward.1} parent=11 // pred_fallthru
          _
      $region12: #{vae_encoder_forward.1} parent=5 // pred_fallthru
        _
      %p306 = scmp.lt.s32.totalorder %s29, 2
      // Predicated region
      $region29: #{vae_encoder_forward.1} parent=5 // pred_check
        %p307 = pneg %p306
      $region30: #{vae_encoder_forward.1} parent=5 // pred_check_branch
        %309 = sbr.rel (%p307) target = $region32
      $region31: #{vae_encoder_forward.1} parent=5 // pred_region
        // Predicated region
        $region33: #{vae_encoder_forward.1} parent=31 // pred_check
          %p310 = pneg %p49
        $region34: #{vae_encoder_forward.1} parent=31 // pred_check_branch
          %312 = sbr.rel (%p310) target = $region36
        $region35: #{vae_encoder_forward.1} parent=31 // pred_region
          %s313 = sand.u32 %s39, 1
          %s314 = scalar_lea.sflag [#allocation3], %s313
          %s315 = sand.u32 %s39, 1
          %s316 = smul.addr %s315, 256
          %s317 = scalar_lea.vmem [#allocation2], %s316
          %s318 = smul.u32 16, %s29
          %s320 = ssub.s32 4096, 4096
          %321 = vsyncadd %s314, %s320
          %s322 = smul.addr %s318, 2
          %s323 = smul.addr %s322, 128
          %s324 = scalar_lea.hbm %s0, %s323
          %s325 = sshll.u32 %s317, 4
          %s326 = int_to_ptr.vmem [resolvable:$true] %s325
          %331 = dma.hbm_to_vmem [thread:$0]  %s324, 4096, %s326, %s314, 256, 256, 16
        $region36: #{vae_encoder_forward.1} parent=31 // pred_fallthru
          _
        // Predicated region
        $region37: #{vae_encoder_forward.1} parent=31 // pred_check
          %p332 = pneg %p159
        $region38: #{vae_encoder_forward.1} parent=31 // pred_check_branch
          %334 = sbr.rel (%p332) target = $region40
        $region39: #{vae_encoder_forward.1} parent=31 // pred_region
          %s335 = sand.u32 %s149, 1
          %s336 = scalar_lea.sflag [#allocation12], %s335
          %s337 = sand.u32 %s149, 1
          %s338 = smul.addr %s337, 256
          %s339 = scalar_lea.vmem [#allocation11], %s338
          %s340 = smul.u32 16, %s29
          %s342 = ssub.s32 4096, 4096
          %343 = vsyncadd %s336, %s342
          %s344 = smul.addr %s340, 2
          %s345 = smul.addr %s344, 128
          %s346 = scalar_lea.hbm %s5, %s345
          %s347 = sshll.u32 %s339, 4
          %s348 = int_to_ptr.vmem [resolvable:$true] %s347
          %353 = dma.hbm_to_vmem [thread:$0]  %s346, 4096, %s348, %s336, 256, 256, 16
        $region40: #{vae_encoder_forward.1} parent=31 // pred_fallthru
          _
      $region32: #{vae_encoder_forward.1} parent=5 // pred_fallthru
        _
      %p354 = scmp.le.s32.totalorder 1, %s29
      %p355 = scmp.lt.s32.totalorder %s29, 3
      %p356 = pnand %p354, %p355
      %p357 = pneg %p356
      // Predicated region
      $region41: #{vae_encoder_forward.1} parent=5 // pred_check
        _
      $region42: #{vae_encoder_forward.1} parent=5 // pred_check_branch
        %359 = sbr.rel (%p356) target = $region44
      $region43: #{vae_encoder_forward.1} parent=5 // pred_region
        %s360 = ssub.s32 %s29, 1
        %s361 = sand.u32 %s42, 1
        %s362 = scalar_lea.sflag [#allocation3], %s361
        %s363 = sand.u32 %s42, 1
        %s364 = smul.addr %s363, 256
        %s365 = scalar_lea.vmem [#allocation2], %s364
        // Predicated region
        $region45: #{vae_encoder_forward.1} parent=43 // pred_check
          %p366 = pneg %p55
        $region46: #{vae_encoder_forward.1} parent=43 // pred_check_branch
          %368 = sbr.rel (%p366) target = $region48
        $region47: #{vae_encoder_forward.1} parent=43 // pred_region
          %369 = dma.done %s362, 4096
        $region48: #{vae_encoder_forward.1} parent=43 // pred_fallthru
          _
        // Predicated region
        $region49: #{vae_encoder_forward.1} parent=43 // pred_check
          %p370 = pneg %p76
        $region50: #{vae_encoder_forward.1} parent=43 // pred_check_branch
          %372 = sbr.rel (%p370) target = $region52
        $region51: #{vae_encoder_forward.1} parent=43 // pred_region
          %373 = dma.done [#allocation6], 4096
        $region52: #{vae_encoder_forward.1} parent=43 // pred_fallthru
          _
        // Predicated region
        $region53: #{vae_encoder_forward.1} parent=43 // pred_check
          %p374 = pneg %p97
        $region54: #{vae_encoder_forward.1} parent=43 // pred_check_branch
          %376 = sbr.rel (%p374) target = $region56
        $region55: #{vae_encoder_forward.1} parent=43 // pred_region
          %377 = dma.done [#allocation6], 32
        $region56: #{vae_encoder_forward.1} parent=43 // pred_fallthru
          _
        // Predicated region
        $region57: #{vae_encoder_forward.1} parent=43 // pred_check
          %p378 = pneg %p118
        $region58: #{vae_encoder_forward.1} parent=43 // pred_check_branch
          %380 = sbr.rel (%p378) target = $region60
        $region59: #{vae_encoder_forward.1} parent=43 // pred_region
          %381 = dma.done [#allocation9], 8192
        $region60: #{vae_encoder_forward.1} parent=43 // pred_fallthru
          _
        // Predicated region
        $region61: #{vae_encoder_forward.1} parent=43 // pred_check
          %p382 = pneg %p139
        $region62: #{vae_encoder_forward.1} parent=43 // pred_check_branch
          %384 = sbr.rel (%p382) target = $region64
        $region63: #{vae_encoder_forward.1} parent=43 // pred_region
          %385 = dma.done [#allocation9], 64
        $region64: #{vae_encoder_forward.1} parent=43 // pred_fallthru
          _
        %s386 = sand.u32 %s152, 1
        %s387 = scalar_lea.sflag [#allocation12], %s386
        %s388 = sand.u32 %s152, 1
        %s389 = smul.addr %s388, 256
        %s390 = scalar_lea.vmem [#allocation11], %s389
        // Predicated region
        $region65: #{vae_encoder_forward.1} parent=43 // pred_check
          %p391 = pneg %p165
        $region66: #{vae_encoder_forward.1} parent=43 // pred_check_branch
          %393 = sbr.rel (%p391) target = $region68
        $region67: #{vae_encoder_forward.1} parent=43 // pred_region
          %394 = dma.done %s387, 4096
        $region68: #{vae_encoder_forward.1} parent=43 // pred_fallthru
          _
        %s395 = sand.u32 %s42, 1
        %s396 = scalar_lea.sflag [#allocation3], %s395
        %s397 = sand.u32 %s42, 1
        %s398 = smul.addr %s397, 256
        %s399 = scalar_lea.vmem [#allocation2], %s398
        %p400 = pneg %p55
        %p401 = pneg %p52
        %p402 = pneg %p76
        %p403 = pneg %p73
        %p404 = pneg %p97
        %p405 = pneg %p94
        %p406 = pneg %p118
        %p407 = pneg %p115
        %p408 = pneg %p139
        %p409 = pneg %p136
        %s410 = sand.u32 %s152, 1
        %s411 = scalar_lea.sflag [#allocation12], %s410
        %s412 = sand.u32 %s152, 1
        %s413 = smul.addr %s412, 256
        %s414 = scalar_lea.vmem [#allocation11], %s413
        %p415 = pneg %p165
        %p416 = pneg %p162
        %p417 = pneg %p191
        %p418 = pneg %p188
        %s419 = sand.u32 %s178, 1
        %s420 = scalar_lea.sflag [#allocation4], %s419
        %s421 = sand.u32 %s178, 1
        %s422 = smul.addr %s421, 256
        %s423 = scalar_lea.vmem [#allocation13], %s422
        %p424 = pneg %p217
        %p425 = pneg %p214
        %s426 = sand.u32 %s34, 1
        %s427 = scalar_lea.sflag [#allocation15], %s426
        %s428 = sand.u32 %s204, 1
        %s429 = smul.addr %s428, 256
        %s430 = scalar_lea.vmem [#allocation14], %s429
        %p431 = pneg %p243
        %p432 = pneg %p240
        %s433 = sand.u32 %s34, 1
        %s434 = scalar_lea.sflag [#allocation15], %s433
        %s435 = sand.u32 %s230, 1
        %s436 = smul.addr %s435, 256
        %s437 = scalar_lea.vmem [#allocation16], %s436
        %s438 = smul.u32 16, %s34
        %s439 = smul.u32 16, %s34
        %s440 = smul.u32 16, %s34
        %s441 = smul.u32 16, %s34
        %s442 = smul.u32 16, %s34
        %v443 = vld [vmem:[%s365] sm:$0xff]
        %v444 = vld [vmem:[%s365 + $0x8] sm:$0xff]
        %v445 = vld [vmem:[%s365 + $0x10] sm:$0xff]
        %v446 = vld [vmem:[%s365 + $0x18] sm:$0xff]
        %v447 = vld [vmem:[%s365 + $0x20] sm:$0xff]
        %v448 = vld [vmem:[%s365 + $0x28] sm:$0xff]
        %v449 = vld [vmem:[%s365 + $0x30] sm:$0xff]
        %v450 = vld [vmem:[%s365 + $0x38] sm:$0xff]
        %v451 = vld [vmem:[%s365 + $0x40] sm:$0xff]
        %v452 = vld [vmem:[%s365 + $0x48] sm:$0xff]
        %v453 = vld [vmem:[%s365 + $0x50] sm:$0xff]
        %v454 = vld [vmem:[%s365 + $0x58] sm:$0xff]
        %v455 = vld [vmem:[%s365 + $0x60] sm:$0xff]
        %v456 = vld [vmem:[%s365 + $0x68] sm:$0xff]
        %v457 = vld [vmem:[%s365 + $0x70] sm:$0xff]
        %v458 = vld [vmem:[%s365 + $0x78] sm:$0xff]
        %v459 = vld [vmem:[%s365 + $0x80] sm:$0xff]
        %v460 = vld [vmem:[%s365 + $0x88] sm:$0xff]
        %v461 = vld [vmem:[%s365 + $0x90] sm:$0xff]
        %v462 = vld [vmem:[%s365 + $0x98] sm:$0xff]
        %v463 = vld [vmem:[%s365 + $0xa0] sm:$0xff]
        %v464 = vld [vmem:[%s365 + $0xa8] sm:$0xff]
        %v465 = vld [vmem:[%s365 + $0xb0] sm:$0xff]
        %v466 = vld [vmem:[%s365 + $0xb8] sm:$0xff]
        %v467 = vld [vmem:[%s365 + $0xc0] sm:$0xff]
        %v468 = vld [vmem:[%s365 + $0xc8] sm:$0xff]
        %v469 = vld [vmem:[%s365 + $0xd0] sm:$0xff]
        %v470 = vld [vmem:[%s365 + $0xd8] sm:$0xff]
        %v471 = vld [vmem:[%s365 + $0xe0] sm:$0xff]
        %v472 = vld [vmem:[%s365 + $0xe8] sm:$0xff]
        %v473 = vld [vmem:[%s365 + $0xf0] sm:$0xff]
        %v474 = vld [vmem:[%s365 + $0xf8] sm:$0xff]
        %v475 = vpack.c.bf16 %v445, %v443
        %v476 = vpack.c.bf16 %v446, %v444
        %v477 = vpack.c.bf16 %v449, %v447
        %v478 = vpack.c.bf16 %v450, %v448
        %v479 = vpack.c.bf16 %v453, %v451
        %v480 = vpack.c.bf16 %v454, %v452
        %v481 = vpack.c.bf16 %v457, %v455
        %v482 = vpack.c.bf16 %v458, %v456
        %v483 = vpack.c.bf16 %v461, %v459
        %v484 = vpack.c.bf16 %v462, %v460
        %v485 = vpack.c.bf16 %v465, %v463
        %v486 = vpack.c.bf16 %v466, %v464
        %v487 = vpack.c.bf16 %v469, %v467
        %v488 = vpack.c.bf16 %v470, %v468
        %v489 = vpack.c.bf16 %v473, %v471
        %v490 = vpack.c.bf16 %v474, %v472
        %v491 = vld [vmem:[#allocation5] sm:$0xff]
        %v492 = vld [vmem:[#allocation5 + $0x8] sm:$0xff]
        %v493 = vld [vmem:[#allocation5 + $0x10] sm:$0xff]
        %v494 = vld [vmem:[#allocation5 + $0x18] sm:$0xff]
        %v495 = vld [vmem:[#allocation5 + $0x20] sm:$0xff]
        %v496 = vld [vmem:[#allocation5 + $0x28] sm:$0xff]
        %v497 = vld [vmem:[#allocation5 + $0x30] sm:$0xff]
        %v498 = vld [vmem:[#allocation5 + $0x38] sm:$0xff]
        %v499 = vld [vmem:[#allocation5 + $0x40] sm:$0xff]
        %v500 = vld [vmem:[#allocation5 + $0x48] sm:$0xff]
        %v501 = vld [vmem:[#allocation5 + $0x50] sm:$0xff]
        %v502 = vld [vmem:[#allocation5 + $0x58] sm:$0xff]
        %v503 = vld [vmem:[#allocation5 + $0x60] sm:$0xff]
        %v504 = vld [vmem:[#allocation5 + $0x68] sm:$0xff]
        %v505 = vld [vmem:[#allocation5 + $0x70] sm:$0xff]
        %v506 = vld [vmem:[#allocation5 + $0x78] sm:$0xff]
        %v507 = vld [vmem:[#allocation5 + $0x80] sm:$0xff]
        %v508 = vld [vmem:[#allocation5 + $0x88] sm:$0xff]
        %v509 = vld [vmem:[#allocation5 + $0x90] sm:$0xff]
        %v510 = vld [vmem:[#allocation5 + $0x98] sm:$0xff]
        %v511 = vld [vmem:[#allocation5 + $0xa0] sm:$0xff]
        %v512 = vld [vmem:[#allocation5 + $0xa8] sm:$0xff]
        %v513 = vld [vmem:[#allocation5 + $0xb0] sm:$0xff]
        %v514 = vld [vmem:[#allocation5 + $0xb8] sm:$0xff]
        %v515 = vld [vmem:[#allocation5 + $0xc0] sm:$0xff]
        %v516 = vld [vmem:[#allocation5 + $0xc8] sm:$0xff]
        %v517 = vld [vmem:[#allocation5 + $0xd0] sm:$0xff]
        %v518 = vld [vmem:[#allocation5 + $0xd8] sm:$0xff]
        %v519 = vld [vmem:[#allocation5 + $0xe0] sm:$0xff]
        %v520 = vld [vmem:[#allocation5 + $0xe8] sm:$0xff]
        %v521 = vld [vmem:[#allocation5 + $0xf0] sm:$0xff]
        %v522 = vld [vmem:[#allocation5 + $0xf8] sm:$0xff]
        %v523 = vld [vmem:[#allocation7] sm:$0x3]
        %v524 = vunpack.c.l.bf16 %v523
        %v526 = vlaneseq
        %v527 = vshrl.u32 %v526, 7
        %v528 = vsub.s32 0, %v527
        %v529 = vrot.slane %v524, %v528
        %v530 = vlaneseq
        %v531 = vshrl.u32 %v530, 7
        %v532 = vsub.s32 2, %v531
        %v533 = vrot.slane %v524, %v532
        %v536 = vlaneseq
        %v537 = vshrl.u32 %v536, 7
        %v538 = vsub.s32 0, %v537
        %v539 = vrot.slane %v529, %v538
        %v540 = vlaneseq
        %v541 = vshrl.u32 %v540, 7
        %v542 = vsub.s32 0, %v541
        %v543 = vrot.slane %v533, %v542
        %v576 = vunpack.c.l.b16 %v491
        %v577 = vunpack.c.h.b16 %v491
        %v578 = vunpack.c.l.b16 %v492
        %v579 = vunpack.c.h.b16 %v492
        %v580 = vunpack.c.l.b16 %v493
        %v581 = vunpack.c.h.b16 %v493
        %v582 = vunpack.c.l.b16 %v494
        %v583 = vunpack.c.h.b16 %v494
        %v584 = vunpack.c.l.b16 %v495
        %v585 = vunpack.c.h.b16 %v495
        %v586 = vunpack.c.l.b16 %v496
        %v587 = vunpack.c.h.b16 %v496
        %v588 = vunpack.c.l.b16 %v497
        %v589 = vunpack.c.h.b16 %v497
        %v590 = vunpack.c.l.b16 %v498
        %v591 = vunpack.c.h.b16 %v498
        %v592 = vunpack.c.l.b16 %v499
        %v593 = vunpack.c.h.b16 %v499
        %v594 = vunpack.c.l.b16 %v500
        %v595 = vunpack.c.h.b16 %v500
        %v596 = vunpack.c.l.b16 %v501
        %v597 = vunpack.c.h.b16 %v501
        %v598 = vunpack.c.l.b16 %v502
        %v599 = vunpack.c.h.b16 %v502
        %v600 = vunpack.c.l.b16 %v503
        %v601 = vunpack.c.h.b16 %v503
        %v602 = vunpack.c.l.b16 %v504
        %v603 = vunpack.c.h.b16 %v504
        %v604 = vunpack.c.l.b16 %v505
        %v605 = vunpack.c.h.b16 %v505
        %v606 = vunpack.c.l.b16 %v506
        %v607 = vunpack.c.h.b16 %v506
        %v608 = vunpack.c.l.b16 %v507
        %v609 = vunpack.c.h.b16 %v507
        %v610 = vunpack.c.l.b16 %v508
        %v611 = vunpack.c.h.b16 %v508
        %v612 = vunpack.c.l.b16 %v509
        %v613 = vunpack.c.h.b16 %v509
        %v614 = vunpack.c.l.b16 %v510
        %v615 = vunpack.c.h.b16 %v510
        %v616 = vunpack.c.l.b16 %v511
        %v617 = vunpack.c.h.b16 %v511
        %v618 = vunpack.c.l.b16 %v512
        %v619 = vunpack.c.h.b16 %v512
        %v620 = vunpack.c.l.b16 %v513
        %v621 = vunpack.c.h.b16 %v513
        %v622 = vunpack.c.l.b16 %v514
        %v623 = vunpack.c.h.b16 %v514
        %v624 = vunpack.c.l.b16 %v515
        %v625 = vunpack.c.h.b16 %v515
        %v626 = vunpack.c.l.b16 %v516
        %v627 = vunpack.c.h.b16 %v516
        %v628 = vunpack.c.l.b16 %v517
        %v629 = vunpack.c.h.b16 %v517
        %v630 = vunpack.c.l.b16 %v518
        %v631 = vunpack.c.h.b16 %v518
        %v632 = vunpack.c.l.b16 %v519
        %v633 = vunpack.c.h.b16 %v519
        %v634 = vunpack.c.l.b16 %v520
        %v635 = vunpack.c.h.b16 %v520
        %v636 = vunpack.c.l.b16 %v521
        %v637 = vunpack.c.h.b16 %v521
        %v638 = vunpack.c.l.b16 %v522
        %v639 = vunpack.c.h.b16 %v522
        %v640 = vpack.c.b16 %v578, %v576
        %v641 = vpack.c.b16 %v579, %v577
        %v642 = vpack.c.b16 %v582, %v580
        %v643 = vpack.c.b16 %v583, %v581
        %v644 = vpack.c.b16 %v586, %v584
        %v645 = vpack.c.b16 %v587, %v585
        %v646 = vpack.c.b16 %v590, %v588
        %v647 = vpack.c.b16 %v591, %v589
        %v648 = vpack.c.b16 %v594, %v592
        %v649 = vpack.c.b16 %v595, %v593
        %v650 = vpack.c.b16 %v598, %v596
        %v651 = vpack.c.b16 %v599, %v597
        %v652 = vpack.c.b16 %v602, %v600
        %v653 = vpack.c.b16 %v603, %v601
        %v654 = vpack.c.b16 %v606, %v604
        %v655 = vpack.c.b16 %v607, %v605
        %v656 = vpack.c.b16 %v610, %v608
        %v657 = vpack.c.b16 %v611, %v609
        %v658 = vpack.c.b16 %v614, %v612
        %v659 = vpack.c.b16 %v615, %v613
        %v660 = vpack.c.b16 %v618, %v616
        %v661 = vpack.c.b16 %v619, %v617
        %v662 = vpack.c.b16 %v622, %v620
        %v663 = vpack.c.b16 %v623, %v621
        %v664 = vpack.c.b16 %v626, %v624
        %v665 = vpack.c.b16 %v627, %v625
        %v666 = vpack.c.b16 %v630, %v628
        %v667 = vpack.c.b16 %v631, %v629
        %v668 = vpack.c.b16 %v634, %v632
        %v669 = vpack.c.b16 %v635, %v633
        %v670 = vpack.c.b16 %v638, %v636
        %v671 = vpack.c.b16 %v639, %v637
        %704 = vmatprep.subr.bf16.mxu0 %v655
        %705 = vmatpush1.bf16.msra.mxu0 %v654
        %706 = vmatprep.subr.bf16.mxu0 %v653
        %707 = vmatpush1.bf16.msra.mxu0 %v652
        %708 = vmatprep.subr.bf16.mxu0 %v651
        %709 = vmatpush1.bf16.msra.mxu0 %v650
        %710 = vmatprep.subr.bf16.mxu0 %v649
        %711 = vmatpush1.bf16.msra.mxu0 %v648
        %712 = vmatprep.subr.bf16.mxu0 %v647
        %713 = vmatpush1.bf16.msra.mxu0 %v646
        %714 = vmatprep.subr.bf16.mxu0 %v645
        %715 = vmatpush1.bf16.msra.mxu0 %v644
        %716 = vmatprep.subr.bf16.mxu0 %v643
        %717 = vmatpush1.bf16.msra.mxu0 %v642
        %718 = vmatprep.subr.bf16.mxu0 %v641
        %719 = vmatpush1.bf16.msra.mxu0 %v640
        %720 = vmatprep.subr.bf16.mxu0 %v671
        %721 = vmatpush2.bf16.msra.mxu0 %v670
        %722 = vmatprep.subr.bf16.mxu0 %v669
        %723 = vmatpush2.bf16.msra.mxu0 %v668
        %724 = vmatprep.subr.bf16.mxu0 %v667
        %725 = vmatpush2.bf16.msra.mxu0 %v666
        %726 = vmatprep.subr.bf16.mxu0 %v665
        %727 = vmatpush2.bf16.msra.mxu0 %v664
        %728 = vmatprep.subr.bf16.mxu0 %v663
        %729 = vmatpush2.bf16.msra.mxu0 %v662
        %730 = vmatprep.subr.bf16.mxu0 %v661
        %731 = vmatpush2.bf16.msra.mxu0 %v660
        %732 = vmatprep.subr.bf16.mxu0 %v659
        %733 = vmatpush2.bf16.msra.mxu0 %v658
        %734 = vmatprep.subr.bf16.mxu0 %v657
        %735 = vmatpush2.bf16.msra.mxu0 %v656
        %736 = vmatprep.mubr.bf16.mxu0 %v476
        %737 = vmatmul.mubr.bf16.gmra.mxu0 %v475
        %v738 = vpop.f32.mrf.mxu0
        %v739 = vadd.f32 %v539, %v738
        %v740 = vpop.f32.mrf.mxu0
        %v741 = vadd.f32 %v543, %v740
        %v742 = vpop.f32.mrf.mxu0
        %v743 = vadd.f32 %v539, %v742
        %v744 = vpop.f32.mrf.mxu0
        %v745 = vadd.f32 %v543, %v744
        %746 = vmatprep.mubr.bf16.mxu0 %v478
        %747 = vmatmul.mubr.bf16.gmra.mxu0 %v477
        %v748 = vpop.f32.mrf.mxu0
        %v749 = vadd.f32 %v539, %v748
        %v750 = vpop.f32.mrf.mxu0
        %v751 = vadd.f32 %v543, %v750
        %v752 = vpop.f32.mrf.mxu0
        %v753 = vadd.f32 %v539, %v752
        %v754 = vpop.f32.mrf.mxu0
        %v755 = vadd.f32 %v543, %v754
        %756 = vmatprep.mubr.bf16.mxu0 %v480
        %757 = vmatmul.mubr.bf16.gmra.mxu0 %v479
        %v758 = vpop.f32.mrf.mxu0
        %v759 = vadd.f32 %v539, %v758
        %v760 = vpop.f32.mrf.mxu0
        %v761 = vadd.f32 %v543, %v760
        %v762 = vpop.f32.mrf.mxu0
        %v763 = vadd.f32 %v539, %v762
        %v764 = vpop.f32.mrf.mxu0
        %v765 = vadd.f32 %v543, %v764
        %766 = vmatprep.mubr.bf16.mxu0 %v482
        %767 = vmatmul.mubr.bf16.gmra.mxu0 %v481
        %v768 = vpop.f32.mrf.mxu0
        %v769 = vadd.f32 %v539, %v768
        %v770 = vpop.f32.mrf.mxu0
        %v771 = vadd.f32 %v543, %v770
        %v772 = vpop.f32.mrf.mxu0
        %v773 = vadd.f32 %v539, %v772
        %v774 = vpop.f32.mrf.mxu0
        %v775 = vadd.f32 %v543, %v774
        %776 = vmatprep.mubr.bf16.mxu0 %v484
        %777 = vmatmul.mubr.bf16.gmra.mxu0 %v483
        %v778 = vpop.f32.mrf.mxu0
        %v779 = vadd.f32 %v539, %v778
        %v780 = vpop.f32.mrf.mxu0
        %v781 = vadd.f32 %v543, %v780
        %v782 = vpop.f32.mrf.mxu0
        %v783 = vadd.f32 %v539, %v782
        %v784 = vpop.f32.mrf.mxu0
        %v785 = vadd.f32 %v543, %v784
        %786 = vmatprep.mubr.bf16.mxu0 %v486
        %787 = vmatmul.mubr.bf16.gmra.mxu0 %v485
        %v788 = vpop.f32.mrf.mxu0
        %v789 = vadd.f32 %v539, %v788
        %v790 = vpop.f32.mrf.mxu0
        %v791 = vadd.f32 %v543, %v790
        %v792 = vpop.f32.mrf.mxu0
        %v793 = vadd.f32 %v539, %v792
        %v794 = vpop.f32.mrf.mxu0
        %v795 = vadd.f32 %v543, %v794
        %796 = vmatprep.mubr.bf16.mxu0 %v488
        %797 = vmatmul.mubr.bf16.gmra.mxu0 %v487
        %v798 = vpop.f32.mrf.mxu0
        %v799 = vadd.f32 %v539, %v798
        %v800 = vpop.f32.mrf.mxu0
        %v801 = vadd.f32 %v543, %v800
        %v802 = vpop.f32.mrf.mxu0
        %v803 = vadd.f32 %v539, %v802
        %v804 = vpop.f32.mrf.mxu0
        %v805 = vadd.f32 %v543, %v804
        %806 = vmatprep.mubr.bf16.mxu0 %v490
        %807 = vmatmul.mubr.bf16.gmra.mxu0 %v489
        %v808 = vpop.f32.mrf.mxu0
        %v809 = vadd.f32 %v539, %v808
        %v810 = vpop.f32.mrf.mxu0
        %v811 = vadd.f32 %v543, %v810
        %v812 = vpop.f32.mrf.mxu0
        %v813 = vadd.f32 %v539, %v812
        %v814 = vpop.f32.mrf.mxu0
        %v815 = vadd.f32 %v543, %v814
        %816 = vdwg.mxu0
        %v817 = vmax.f32 %v739, 0.0
        %v818 = vmax.f32 %v741, 0.0
        %v819 = vmax.f32 %v743, 0.0
        %v820 = vmax.f32 %v745, 0.0
        %v821 = vmax.f32 %v749, 0.0
        %v822 = vmax.f32 %v751, 0.0
        %v823 = vmax.f32 %v753, 0.0
        %v824 = vmax.f32 %v755, 0.0
        %v825 = vmax.f32 %v759, 0.0
        %v826 = vmax.f32 %v761, 0.0
        %v827 = vmax.f32 %v763, 0.0
        %v828 = vmax.f32 %v765, 0.0
        %v829 = vmax.f32 %v769, 0.0
        %v830 = vmax.f32 %v771, 0.0
        %v831 = vmax.f32 %v773, 0.0
        %v832 = vmax.f32 %v775, 0.0
        %v833 = vmax.f32 %v779, 0.0
        %v834 = vmax.f32 %v781, 0.0
        %v835 = vmax.f32 %v783, 0.0
        %v836 = vmax.f32 %v785, 0.0
        %v837 = vmax.f32 %v789, 0.0
        %v838 = vmax.f32 %v791, 0.0
        %v839 = vmax.f32 %v793, 0.0
        %v840 = vmax.f32 %v795, 0.0
        %v841 = vmax.f32 %v799, 0.0
        %v842 = vmax.f32 %v801, 0.0
        %v843 = vmax.f32 %v803, 0.0
        %v844 = vmax.f32 %v805, 0.0
        %v845 = vmax.f32 %v809, 0.0
        %v846 = vmax.f32 %v811, 0.0
        %v847 = vmax.f32 %v813, 0.0
        %v848 = vmax.f32 %v815, 0.0
        %v849 = vpack.c.bf16 %v819, %v817
        %v850 = vpack.c.bf16 %v820, %v818
        %v851 = vpack.c.bf16 %v823, %v821
        %v852 = vpack.c.bf16 %v824, %v822
        %v853 = vpack.c.bf16 %v827, %v825
        %v854 = vpack.c.bf16 %v828, %v826
        %v855 = vpack.c.bf16 %v831, %v829
        %v856 = vpack.c.bf16 %v832, %v830
        %v857 = vpack.c.bf16 %v835, %v833
        %v858 = vpack.c.bf16 %v836, %v834
        %v859 = vpack.c.bf16 %v839, %v837
        %v860 = vpack.c.bf16 %v840, %v838
        %v861 = vpack.c.bf16 %v843, %v841
        %v862 = vpack.c.bf16 %v844, %v842
        %v863 = vpack.c.bf16 %v847, %v845
        %v864 = vpack.c.bf16 %v848, %v846
        %v865 = vld [vmem:[#allocation8] sm:$0xff]
        %v866 = vld [vmem:[#allocation8 + $0x8] sm:$0xff]
        %v867 = vld [vmem:[#allocation8 + $0x10] sm:$0xff]
        %v868 = vld [vmem:[#allocation8 + $0x18] sm:$0xff]
        %v869 = vld [vmem:[#allocation8 + $0x20] sm:$0xff]
        %v870 = vld [vmem:[#allocation8 + $0x28] sm:$0xff]
        %v871 = vld [vmem:[#allocation8 + $0x30] sm:$0xff]
        %v872 = vld [vmem:[#allocation8 + $0x38] sm:$0xff]
        %v873 = vld [vmem:[#allocation8 + $0x40] sm:$0xff]
        %v874 = vld [vmem:[#allocation8 + $0x48] sm:$0xff]
        %v875 = vld [vmem:[#allocation8 + $0x50] sm:$0xff]
        %v876 = vld [vmem:[#allocation8 + $0x58] sm:$0xff]
        %v877 = vld [vmem:[#allocation8 + $0x60] sm:$0xff]
        %v878 = vld [vmem:[#allocation8 + $0x68] sm:$0xff]
        %v879 = vld [vmem:[#allocation8 + $0x70] sm:$0xff]
        %v880 = vld [vmem:[#allocation8 + $0x78] sm:$0xff]
        %v881 = vld [vmem:[#allocation8 + $0x80] sm:$0xff]
        %v882 = vld [vmem:[#allocation8 + $0x88] sm:$0xff]
        %v883 = vld [vmem:[#allocation8 + $0x90] sm:$0xff]
        %v884 = vld [vmem:[#allocation8 + $0x98] sm:$0xff]
        %v885 = vld [vmem:[#allocation8 + $0xa0] sm:$0xff]
        %v886 = vld [vmem:[#allocation8 + $0xa8] sm:$0xff]
        %v887 = vld [vmem:[#allocation8 + $0xb0] sm:$0xff]
        %v888 = vld [vmem:[#allocation8 + $0xb8] sm:$0xff]
        %v889 = vld [vmem:[#allocation8 + $0xc0] sm:$0xff]
        %v890 = vld [vmem:[#allocation8 + $0xc8] sm:$0xff]
        %v891 = vld [vmem:[#allocation8 + $0xd0] sm:$0xff]
        %v892 = vld [vmem:[#allocation8 + $0xd8] sm:$0xff]
        %v893 = vld [vmem:[#allocation8 + $0xe0] sm:$0xff]
        %v894 = vld [vmem:[#allocation8 + $0xe8] sm:$0xff]
        %v895 = vld [vmem:[#allocation8 + $0xf0] sm:$0xff]
        %v896 = vld [vmem:[#allocation8 + $0xf8] sm:$0xff]
        %v897 = vld [vmem:[#allocation8 + $0x100] sm:$0xff]
        %v898 = vld [vmem:[#allocation8 + $0x108] sm:$0xff]
        %v899 = vld [vmem:[#allocation8 + $0x110] sm:$0xff]
        %v900 = vld [vmem:[#allocation8 + $0x118] sm:$0xff]
        %v901 = vld [vmem:[#allocation8 + $0x120] sm:$0xff]
        %v902 = vld [vmem:[#allocation8 + $0x128] sm:$0xff]
        %v903 = vld [vmem:[#allocation8 + $0x130] sm:$0xff]
        %v904 = vld [vmem:[#allocation8 + $0x138] sm:$0xff]
        %v905 = vld [vmem:[#allocation8 + $0x140] sm:$0xff]
        %v906 = vld [vmem:[#allocation8 + $0x148] sm:$0xff]
        %v907 = vld [vmem:[#allocation8 + $0x150] sm:$0xff]
        %v908 = vld [vmem:[#allocation8 + $0x158] sm:$0xff]
        %v909 = vld [vmem:[#allocation8 + $0x160] sm:$0xff]
        %v910 = vld [vmem:[#allocation8 + $0x168] sm:$0xff]
        %v911 = vld [vmem:[#allocation8 + $0x170] sm:$0xff]
        %v912 = vld [vmem:[#allocation8 + $0x178] sm:$0xff]
        %v913 = vld [vmem:[#allocation8 + $0x180] sm:$0xff]
        %v914 = vld [vmem:[#allocation8 + $0x188] sm:$0xff]
        %v915 = vld [vmem:[#allocation8 + $0x190] sm:$0xff]
        %v916 = vld [vmem:[#allocation8 + $0x198] sm:$0xff]
        %v917 = vld [vmem:[#allocation8 + $0x1a0] sm:$0xff]
        %v918 = vld [vmem:[#allocation8 + $0x1a8] sm:$0xff]
        %v919 = vld [vmem:[#allocation8 + $0x1b0] sm:$0xff]
        %v920 = vld [vmem:[#allocation8 + $0x1b8] sm:$0xff]
        %v921 = vld [vmem:[#allocation8 + $0x1c0] sm:$0xff]
        %v922 = vld [vmem:[#allocation8 + $0x1c8] sm:$0xff]
        %v923 = vld [vmem:[#allocation8 + $0x1d0] sm:$0xff]
        %v924 = vld [vmem:[#allocation8 + $0x1d8] sm:$0xff]
        %v925 = vld [vmem:[#allocation8 + $0x1e0] sm:$0xff]
        %v926 = vld [vmem:[#allocation8 + $0x1e8] sm:$0xff]
        %v927 = vld [vmem:[#allocation8 + $0x1f0] sm:$0xff]
        %v928 = vld [vmem:[#allocation8 + $0x1f8] sm:$0xff]
        %v929 = vld [vmem:[#allocation10] sm:$0xf]
        %v930 = vunpack.c.l.bf16 %v929
        %v932 = vlaneseq
        %v933 = vshrl.u32 %v932, 7
        %v934 = vsub.s32 0, %v933
        %v935 = vrot.slane %v930, %v934
        %v936 = vlaneseq
        %v937 = vshrl.u32 %v936, 7
        %v938 = vsub.s32 2, %v937
        %v939 = vrot.slane %v930, %v938
        %v940 = vlaneseq
        %v941 = vshrl.u32 %v940, 7
        %v942 = vsub.s32 4, %v941
        %v943 = vrot.slane %v930, %v942
        %v944 = vlaneseq
        %v945 = vshrl.u32 %v944, 7
        %v946 = vsub.s32 6, %v945
        %v947 = vrot.slane %v930, %v946
        %v952 = vlaneseq
        %v953 = vshrl.u32 %v952, 7
        %v954 = vsub.s32 0, %v953
        %v955 = vrot.slane %v935, %v954
        %v956 = vlaneseq
        %v957 = vshrl.u32 %v956, 7
        %v958 = vsub.s32 0, %v957
        %v959 = vrot.slane %v939, %v958
        %v960 = vlaneseq
        %v961 = vshrl.u32 %v960, 7
        %v962 = vsub.s32 0, %v961
        %v963 = vrot.slane %v943, %v962
        %v964 = vlaneseq
        %v965 = vshrl.u32 %v964, 7
        %v966 = vsub.s32 0, %v965
        %v967 = vrot.slane %v947, %v966
        %v1032 = vunpack.c.l.b16 %v865
        %v1033 = vunpack.c.h.b16 %v865
        %v1034 = vunpack.c.l.b16 %v866
        %v1035 = vunpack.c.h.b16 %v866
        %v1036 = vunpack.c.l.b16 %v867
        %v1037 = vunpack.c.h.b16 %v867
        %v1038 = vunpack.c.l.b16 %v868
        %v1039 = vunpack.c.h.b16 %v868
        %v1040 = vunpack.c.l.b16 %v869
        %v1041 = vunpack.c.h.b16 %v869
        %v1042 = vunpack.c.l.b16 %v870
        %v1043 = vunpack.c.h.b16 %v870
        %v1044 = vunpack.c.l.b16 %v871
        %v1045 = vunpack.c.h.b16 %v871
        %v1046 = vunpack.c.l.b16 %v872
        %v1047 = vunpack.c.h.b16 %v872
        %v1048 = vunpack.c.l.b16 %v873
        %v1049 = vunpack.c.h.b16 %v873
        %v1050 = vunpack.c.l.b16 %v874
        %v1051 = vunpack.c.h.b16 %v874
        %v1052 = vunpack.c.l.b16 %v875
        %v1053 = vunpack.c.h.b16 %v875
        %v1054 = vunpack.c.l.b16 %v876
        %v1055 = vunpack.c.h.b16 %v876
        %v1056 = vunpack.c.l.b16 %v877
        %v1057 = vunpack.c.h.b16 %v877
        %v1058 = vunpack.c.l.b16 %v878
        %v1059 = vunpack.c.h.b16 %v878
        %v1060 = vunpack.c.l.b16 %v879
        %v1061 = vunpack.c.h.b16 %v879
        %v1062 = vunpack.c.l.b16 %v880
        %v1063 = vunpack.c.h.b16 %v880
        %v1064 = vunpack.c.l.b16 %v881
        %v1065 = vunpack.c.h.b16 %v881
        %v1066 = vunpack.c.l.b16 %v882
        %v1067 = vunpack.c.h.b16 %v882
        %v1068 = vunpack.c.l.b16 %v883
        %v1069 = vunpack.c.h.b16 %v883
        %v1070 = vunpack.c.l.b16 %v884
        %v1071 = vunpack.c.h.b16 %v884
        %v1072 = vunpack.c.l.b16 %v885
        %v1073 = vunpack.c.h.b16 %v885
        %v1074 = vunpack.c.l.b16 %v886
        %v1075 = vunpack.c.h.b16 %v886
        %v1076 = vunpack.c.l.b16 %v887
        %v1077 = vunpack.c.h.b16 %v887
        %v1078 = vunpack.c.l.b16 %v888
        %v1079 = vunpack.c.h.b16 %v888
        %v1080 = vunpack.c.l.b16 %v889
        %v1081 = vunpack.c.h.b16 %v889
        %v1082 = vunpack.c.l.b16 %v890
        %v1083 = vunpack.c.h.b16 %v890
        %v1084 = vunpack.c.l.b16 %v891
        %v1085 = vunpack.c.h.b16 %v891
        %v1086 = vunpack.c.l.b16 %v892
        %v1087 = vunpack.c.h.b16 %v892
        %v1088 = vunpack.c.l.b16 %v893
        %v1089 = vunpack.c.h.b16 %v893
        %v1090 = vunpack.c.l.b16 %v894
        %v1091 = vunpack.c.h.b16 %v894
        %v1092 = vunpack.c.l.b16 %v895
        %v1093 = vunpack.c.h.b16 %v895
        %v1094 = vunpack.c.l.b16 %v896
        %v1095 = vunpack.c.h.b16 %v896
        %v1096 = vunpack.c.l.b16 %v897
        %v1097 = vunpack.c.h.b16 %v897
        %v1098 = vunpack.c.l.b16 %v898
        %v1099 = vunpack.c.h.b16 %v898
        %v1100 = vunpack.c.l.b16 %v899
        %v1101 = vunpack.c.h.b16 %v899
        %v1102 = vunpack.c.l.b16 %v900
        %v1103 = vunpack.c.h.b16 %v900
        %v1104 = vunpack.c.l.b16 %v901
        %v1105 = vunpack.c.h.b16 %v901
        %v1106 = vunpack.c.l.b16 %v902
        %v1107 = vunpack.c.h.b16 %v902
        %v1108 = vunpack.c.l.b16 %v903
        %v1109 = vunpack.c.h.b16 %v903
        %v1110 = vunpack.c.l.b16 %v904
        %v1111 = vunpack.c.h.b16 %v904
        %v1112 = vunpack.c.l.b16 %v905
        %v1113 = vunpack.c.h.b16 %v905
        %v1114 = vunpack.c.l.b16 %v906
        %v1115 = vunpack.c.h.b16 %v906
        %v1116 = vunpack.c.l.b16 %v907
        %v1117 = vunpack.c.h.b16 %v907
        %v1118 = vunpack.c.l.b16 %v908
        %v1119 = vunpack.c.h.b16 %v908
        %v1120 = vunpack.c.l.b16 %v909
        %v1121 = vunpack.c.h.b16 %v909
        %v1122 = vunpack.c.l.b16 %v910
        %v1123 = vunpack.c.h.b16 %v910
        %v1124 = vunpack.c.l.b16 %v911
        %v1125 = vunpack.c.h.b16 %v911
        %v1126 = vunpack.c.l.b16 %v912
        %v1127 = vunpack.c.h.b16 %v912
        %v1128 = vunpack.c.l.b16 %v913
        %v1129 = vunpack.c.h.b16 %v913
        %v1130 = vunpack.c.l.b16 %v914
        %v1131 = vunpack.c.h.b16 %v914
        %v1132 = vunpack.c.l.b16 %v915
        %v1133 = vunpack.c.h.b16 %v915
        %v1134 = vunpack.c.l.b16 %v916
        %v1135 = vunpack.c.h.b16 %v916
        %v1136 = vunpack.c.l.b16 %v917
        %v1137 = vunpack.c.h.b16 %v917
        %v1138 = vunpack.c.l.b16 %v918
        %v1139 = vunpack.c.h.b16 %v918
        %v1140 = vunpack.c.l.b16 %v919
        %v1141 = vunpack.c.h.b16 %v919
        %v1142 = vunpack.c.l.b16 %v920
        %v1143 = vunpack.c.h.b16 %v920
        %v1144 = vunpack.c.l.b16 %v921
        %v1145 = vunpack.c.h.b16 %v921
        %v1146 = vunpack.c.l.b16 %v922
        %v1147 = vunpack.c.h.b16 %v922
        %v1148 = vunpack.c.l.b16 %v923
        %v1149 = vunpack.c.h.b16 %v923
        %v1150 = vunpack.c.l.b16 %v924
        %v1151 = vunpack.c.h.b16 %v924
        %v1152 = vunpack.c.l.b16 %v925
        %v1153 = vunpack.c.h.b16 %v925
        %v1154 = vunpack.c.l.b16 %v926
        %v1155 = vunpack.c.h.b16 %v926
        %v1156 = vunpack.c.l.b16 %v927
        %v1157 = vunpack.c.h.b16 %v927
        %v1158 = vunpack.c.l.b16 %v928
        %v1159 = vunpack.c.h.b16 %v928
        %v1160 = vpack.c.b16 %v1036, %v1032
        %v1161 = vpack.c.b16 %v1037, %v1033
        %v1162 = vpack.c.b16 %v1038, %v1034
        %v1163 = vpack.c.b16 %v1039, %v1035
        %v1164 = vpack.c.b16 %v1044, %v1040
        %v1165 = vpack.c.b16 %v1045, %v1041
        %v1166 = vpack.c.b16 %v1046, %v1042
        %v1167 = vpack.c.b16 %v1047, %v1043
        %v1168 = vpack.c.b16 %v1052, %v1048
        %v1169 = vpack.c.b16 %v1053, %v1049
        %v1170 = vpack.c.b16 %v1054, %v1050
        %v1171 = vpack.c.b16 %v1055, %v1051
        %v1172 = vpack.c.b16 %v1060, %v1056
        %v1173 = vpack.c.b16 %v1061, %v1057
        %v1174 = vpack.c.b16 %v1062, %v1058
        %v1175 = vpack.c.b16 %v1063, %v1059
        %v1176 = vpack.c.b16 %v1068, %v1064
        %v1177 = vpack.c.b16 %v1069, %v1065
        %v1178 = vpack.c.b16 %v1070, %v1066
        %v1179 = vpack.c.b16 %v1071, %v1067
        %v1180 = vpack.c.b16 %v1076, %v1072
        %v1181 = vpack.c.b16 %v1077, %v1073
        %v1182 = vpack.c.b16 %v1078, %v1074
        %v1183 = vpack.c.b16 %v1079, %v1075
        %v1184 = vpack.c.b16 %v1084, %v1080
        %v1185 = vpack.c.b16 %v1085, %v1081
        %v1186 = vpack.c.b16 %v1086, %v1082
        %v1187 = vpack.c.b16 %v1087, %v1083
        %v1188 = vpack.c.b16 %v1092, %v1088
        %v1189 = vpack.c.b16 %v1093, %v1089
        %v1190 = vpack.c.b16 %v1094, %v1090
        %v1191 = vpack.c.b16 %v1095, %v1091
        %v1192 = vpack.c.b16 %v1100, %v1096
        %v1193 = vpack.c.b16 %v1101, %v1097
        %v1194 = vpack.c.b16 %v1102, %v1098
        %v1195 = vpack.c.b16 %v1103, %v1099
        %v1196 = vpack.c.b16 %v1108, %v1104
        %v1197 = vpack.c.b16 %v1109, %v1105
        %v1198 = vpack.c.b16 %v1110, %v1106
        %v1199 = vpack.c.b16 %v1111, %v1107
        %v1200 = vpack.c.b16 %v1116, %v1112
        %v1201 = vpack.c.b16 %v1117, %v1113
        %v1202 = vpack.c.b16 %v1118, %v1114
        %v1203 = vpack.c.b16 %v1119, %v1115
        %v1204 = vpack.c.b16 %v1124, %v1120
        %v1205 = vpack.c.b16 %v1125, %v1121
        %v1206 = vpack.c.b16 %v1126, %v1122
        %v1207 = vpack.c.b16 %v1127, %v1123
        %v1208 = vpack.c.b16 %v1132, %v1128
        %v1209 = vpack.c.b16 %v1133, %v1129
        %v1210 = vpack.c.b16 %v1134, %v1130
        %v1211 = vpack.c.b16 %v1135, %v1131
        %v1212 = vpack.c.b16 %v1140, %v1136
        %v1213 = vpack.c.b16 %v1141, %v1137
        %v1214 = vpack.c.b16 %v1142, %v1138
        %v1215 = vpack.c.b16 %v1143, %v1139
        %v1216 = vpack.c.b16 %v1148, %v1144
        %v1217 = vpack.c.b16 %v1149, %v1145
        %v1218 = vpack.c.b16 %v1150, %v1146
        %v1219 = vpack.c.b16 %v1151, %v1147
        %v1220 = vpack.c.b16 %v1156, %v1152
        %v1221 = vpack.c.b16 %v1157, %v1153
        %v1222 = vpack.c.b16 %v1158, %v1154
        %v1223 = vpack.c.b16 %v1159, %v1155
        %1288 = vmatprep.subr.bf16.mxu0 %v1189
        %1289 = vmatpush1.bf16.msra.mxu0 %v1188
        %1290 = vmatprep.subr.bf16.mxu0 %v1185
        %1291 = vmatpush1.bf16.msra.mxu0 %v1184
        %1292 = vmatprep.subr.bf16.mxu0 %v1181
        %1293 = vmatpush1.bf16.msra.mxu0 %v1180
        %1294 = vmatprep.subr.bf16.mxu0 %v1177
        %1295 = vmatpush1.bf16.msra.mxu0 %v1176
        %1296 = vmatprep.subr.bf16.mxu0 %v1173
        %1297 = vmatpush1.bf16.msra.mxu0 %v1172
        %1298 = vmatprep.subr.bf16.mxu0 %v1169
        %1299 = vmatpush1.bf16.msra.mxu0 %v1168
        %1300 = vmatprep.subr.bf16.mxu0 %v1165
        %1301 = vmatpush1.bf16.msra.mxu0 %v1164
        %1302 = vmatprep.subr.bf16.mxu0 %v1161
        %1303 = vmatpush1.bf16.msra.mxu0 %v1160
        %1304 = vmatprep.subr.bf16.mxu0 %v1221
        %1305 = vmatpush2.bf16.msra.mxu0 %v1220
        %1306 = vmatprep.subr.bf16.mxu0 %v1217
        %1307 = vmatpush2.bf16.msra.mxu0 %v1216
        %1308 = vmatprep.subr.bf16.mxu0 %v1213
        %1309 = vmatpush2.bf16.msra.mxu0 %v1212
        %1310 = vmatprep.subr.bf16.mxu0 %v1209
        %1311 = vmatpush2.bf16.msra.mxu0 %v1208
        %1312 = vmatprep.subr.bf16.mxu0 %v1205
        %1313 = vmatpush2.bf16.msra.mxu0 %v1204
        %1314 = vmatprep.subr.bf16.mxu0 %v1201
        %1315 = vmatpush2.bf16.msra.mxu0 %v1200
        %1316 = vmatprep.subr.bf16.mxu0 %v1197
        %1317 = vmatpush2.bf16.msra.mxu0 %v1196
        %1318 = vmatprep.subr.bf16.mxu0 %v1193
        %1319 = vmatpush2.bf16.msra.mxu0 %v1192
        %1320 = vmatprep.mubr.bf16.mxu0 %v850
        %1321 = vmatmul.mubr.bf16.gmra.mxu0 %v849
        %v1322 = vpop.f32.mrf.mxu0
        %v1323 = vadd.f32 %v955, %v1322
        %v1324 = vpop.f32.mrf.mxu0
        %v1325 = vadd.f32 %v959, %v1324
        %v1326 = vpop.f32.mrf.mxu0
        %v1327 = vadd.f32 %v955, %v1326
        %v1328 = vpop.f32.mrf.mxu0
        %v1329 = vadd.f32 %v959, %v1328
        %1330 = vmatprep.mubr.bf16.mxu0 %v852
        %1331 = vmatmul.mubr.bf16.gmra.mxu0 %v851
        %v1332 = vpop.f32.mrf.mxu0
        %v1333 = vadd.f32 %v955, %v1332
        %v1334 = vpop.f32.mrf.mxu0
        %v1335 = vadd.f32 %v959, %v1334
        %v1336 = vpop.f32.mrf.mxu0
        %v1337 = vadd.f32 %v955, %v1336
        %v1338 = vpop.f32.mrf.mxu0
        %v1339 = vadd.f32 %v959, %v1338
        %1340 = vmatprep.mubr.bf16.mxu0 %v854
        %1341 = vmatmul.mubr.bf16.gmra.mxu0 %v853
        %v1342 = vpop.f32.mrf.mxu0
        %v1343 = vadd.f32 %v955, %v1342
        %v1344 = vpop.f32.mrf.mxu0
        %v1345 = vadd.f32 %v959, %v1344
        %v1346 = vpop.f32.mrf.mxu0
        %v1347 = vadd.f32 %v955, %v1346
        %v1348 = vpop.f32.mrf.mxu0
        %v1349 = vadd.f32 %v959, %v1348
        %1350 = vmatprep.mubr.bf16.mxu0 %v856
        %1351 = vmatmul.mubr.bf16.gmra.mxu0 %v855
        %v1352 = vpop.f32.mrf.mxu0
        %v1353 = vadd.f32 %v955, %v1352
        %v1354 = vpop.f32.mrf.mxu0
        %v1355 = vadd.f32 %v959, %v1354
        %v1356 = vpop.f32.mrf.mxu0
        %v1357 = vadd.f32 %v955, %v1356
        %v1358 = vpop.f32.mrf.mxu0
        %v1359 = vadd.f32 %v959, %v1358
        %1360 = vmatprep.mubr.bf16.mxu0 %v858
        %1361 = vmatmul.mubr.bf16.gmra.mxu0 %v857
        %v1362 = vpop.f32.mrf.mxu0
        %v1363 = vadd.f32 %v955, %v1362
        %v1364 = vpop.f32.mrf.mxu0
        %v1365 = vadd.f32 %v959, %v1364
        %v1366 = vpop.f32.mrf.mxu0
        %v1367 = vadd.f32 %v955, %v1366
        %v1368 = vpop.f32.mrf.mxu0
        %v1369 = vadd.f32 %v959, %v1368
        %1370 = vmatprep.mubr.bf16.mxu0 %v860
        %1371 = vmatmul.mubr.bf16.gmra.mxu0 %v859
        %v1372 = vpop.f32.mrf.mxu0
        %v1373 = vadd.f32 %v955, %v1372
        %v1374 = vpop.f32.mrf.mxu0
        %v1375 = vadd.f32 %v959, %v1374
        %v1376 = vpop.f32.mrf.mxu0
        %v1377 = vadd.f32 %v955, %v1376
        %v1378 = vpop.f32.mrf.mxu0
        %v1379 = vadd.f32 %v959, %v1378
        %1380 = vmatprep.mubr.bf16.mxu0 %v862
        %1381 = vmatmul.mubr.bf16.gmra.mxu0 %v861
        %v1382 = vpop.f32.mrf.mxu0
        %v1383 = vadd.f32 %v955, %v1382
        %v1384 = vpop.f32.mrf.mxu0
        %v1385 = vadd.f32 %v959, %v1384
        %v1386 = vpop.f32.mrf.mxu0
        %v1387 = vadd.f32 %v955, %v1386
        %v1388 = vpop.f32.mrf.mxu0
        %v1389 = vadd.f32 %v959, %v1388
        %1390 = vmatprep.mubr.bf16.mxu0 %v864
        %1391 = vmatmul.mubr.bf16.gmra.mxu0 %v863
        %v1392 = vpop.f32.mrf.mxu0
        %v1393 = vadd.f32 %v955, %v1392
        %v1394 = vpop.f32.mrf.mxu0
        %v1395 = vadd.f32 %v959, %v1394
        %v1396 = vpop.f32.mrf.mxu0
        %v1397 = vadd.f32 %v955, %v1396
        %v1398 = vpop.f32.mrf.mxu0
        %v1399 = vadd.f32 %v959, %v1398
        %1400 = vdwg.mxu0
        %1401 = vmatprep.subr.bf16.mxu0 %v1191
        %1402 = vmatpush1.bf16.msra.mxu0 %v1190
        %1403 = vmatprep.subr.bf16.mxu0 %v1187
        %1404 = vmatpush1.bf16.msra.mxu0 %v1186
        %1405 = vmatprep.subr.bf16.mxu0 %v1183
        %1406 = vmatpush1.bf16.msra.mxu0 %v1182
        %1407 = vmatprep.subr.bf16.mxu0 %v1179
        %1408 = vmatpush1.bf16.msra.mxu0 %v1178
        %1409 = vmatprep.subr.bf16.mxu0 %v1175
        %1410 = vmatpush1.bf16.msra.mxu0 %v1174
        %1411 = vmatprep.subr.bf16.mxu0 %v1171
        %1412 = vmatpush1.bf16.msra.mxu0 %v1170
        %1413 = vmatprep.subr.bf16.mxu0 %v1167
        %1414 = vmatpush1.bf16.msra.mxu0 %v1166
        %1415 = vmatprep.subr.bf16.mxu0 %v1163
        %1416 = vmatpush1.bf16.msra.mxu0 %v1162
        %1417 = vmatprep.subr.bf16.mxu0 %v1223
        %1418 = vmatpush2.bf16.msra.mxu0 %v1222
        %1419 = vmatprep.subr.bf16.mxu0 %v1219
        %1420 = vmatpush2.bf16.msra.mxu0 %v1218
        %1421 = vmatprep.subr.bf16.mxu0 %v1215
        %1422 = vmatpush2.bf16.msra.mxu0 %v1214
        %1423 = vmatprep.subr.bf16.mxu0 %v1211
        %1424 = vmatpush2.bf16.msra.mxu0 %v1210
        %1425 = vmatprep.subr.bf16.mxu0 %v1207
        %1426 = vmatpush2.bf16.msra.mxu0 %v1206
        %1427 = vmatprep.subr.bf16.mxu0 %v1203
        %1428 = vmatpush2.bf16.msra.mxu0 %v1202
        %1429 = vmatprep.subr.bf16.mxu0 %v1199
        %1430 = vmatpush2.bf16.msra.mxu0 %v1198
        %1431 = vmatprep.subr.bf16.mxu0 %v1195
        %1432 = vmatpush2.bf16.msra.mxu0 %v1194
        %1433 = vmatprep.mubr.bf16.mxu0 %v850
        %1434 = vmatmul.mubr.bf16.gmra.mxu0 %v849
        %v1435 = vpop.f32.mrf.mxu0
        %v1436 = vadd.f32 %v963, %v1435
        %v1437 = vpop.f32.mrf.mxu0
        %v1438 = vadd.f32 %v967, %v1437
        %v1439 = vpop.f32.mrf.mxu0
        %v1440 = vadd.f32 %v963, %v1439
        %v1441 = vpop.f32.mrf.mxu0
        %v1442 = vadd.f32 %v967, %v1441
        %1443 = vmatprep.mubr.bf16.mxu0 %v852
        %1444 = vmatmul.mubr.bf16.gmra.mxu0 %v851
        %v1445 = vpop.f32.mrf.mxu0
        %v1446 = vadd.f32 %v963, %v1445
        %v1447 = vpop.f32.mrf.mxu0
        %v1448 = vadd.f32 %v967, %v1447
        %v1449 = vpop.f32.mrf.mxu0
        %v1450 = vadd.f32 %v963, %v1449
        %v1451 = vpop.f32.mrf.mxu0
        %v1452 = vadd.f32 %v967, %v1451
        %1453 = vmatprep.mubr.bf16.mxu0 %v854
        %1454 = vmatmul.mubr.bf16.gmra.mxu0 %v853
        %v1455 = vpop.f32.mrf.mxu0
        %v1456 = vadd.f32 %v963, %v1455
        %v1457 = vpop.f32.mrf.mxu0
        %v1458 = vadd.f32 %v967, %v1457
        %v1459 = vpop.f32.mrf.mxu0
        %v1460 = vadd.f32 %v963, %v1459
        %v1461 = vpop.f32.mrf.mxu0
        %v1462 = vadd.f32 %v967, %v1461
        %1463 = vmatprep.mubr.bf16.mxu0 %v856
        %1464 = vmatmul.mubr.bf16.gmra.mxu0 %v855
        %v1465 = vpop.f32.mrf.mxu0
        %v1466 = vadd.f32 %v963, %v1465
        %v1467 = vpop.f32.mrf.mxu0
        %v1468 = vadd.f32 %v967, %v1467
        %v1469 = vpop.f32.mrf.mxu0
        %v1470 = vadd.f32 %v963, %v1469
        %v1471 = vpop.f32.mrf.mxu0
        %v1472 = vadd.f32 %v967, %v1471
        %1473 = vmatprep.mubr.bf16.mxu0 %v858
        %1474 = vmatmul.mubr.bf16.gmra.mxu0 %v857
        %v1475 = vpop.f32.mrf.mxu0
        %v1476 = vadd.f32 %v963, %v1475
        %v1477 = vpop.f32.mrf.mxu0
        %v1478 = vadd.f32 %v967, %v1477
        %v1479 = vpop.f32.mrf.mxu0
        %v1480 = vadd.f32 %v963, %v1479
        %v1481 = vpop.f32.mrf.mxu0
        %v1482 = vadd.f32 %v967, %v1481
        %1483 = vmatprep.mubr.bf16.mxu0 %v860
        %1484 = vmatmul.mubr.bf16.gmra.mxu0 %v859
        %v1485 = vpop.f32.mrf.mxu0
        %v1486 = vadd.f32 %v963, %v1485
        %v1487 = vpop.f32.mrf.mxu0
        %v1488 = vadd.f32 %v967, %v1487
        %v1489 = vpop.f32.mrf.mxu0
        %v1490 = vadd.f32 %v963, %v1489
        %v1491 = vpop.f32.mrf.mxu0
        %v1492 = vadd.f32 %v967, %v1491
        %1493 = vmatprep.mubr.bf16.mxu0 %v862
        %1494 = vmatmul.mubr.bf16.gmra.mxu0 %v861
        %v1495 = vpop.f32.mrf.mxu0
        %v1496 = vadd.f32 %v963, %v1495
        %v1497 = vpop.f32.mrf.mxu0
        %v1498 = vadd.f32 %v967, %v1497
        %v1499 = vpop.f32.mrf.mxu0
        %v1500 = vadd.f32 %v963, %v1499
        %v1501 = vpop.f32.mrf.mxu0
        %v1502 = vadd.f32 %v967, %v1501
        %1503 = vmatprep.mubr.bf16.mxu0 %v864
        %1504 = vmatmul.mubr.bf16.gmra.mxu0 %v863
        %v1505 = vpop.f32.mrf.mxu0
        %v1506 = vadd.f32 %v963, %v1505
        %v1507 = vpop.f32.mrf.mxu0
        %v1508 = vadd.f32 %v967, %v1507
        %v1509 = vpop.f32.mrf.mxu0
        %v1510 = vadd.f32 %v963, %v1509
        %v1511 = vpop.f32.mrf.mxu0
        %v1512 = vadd.f32 %v967, %v1511
        %1513 = vdwg.mxu0
        %v1514 = vmul.f32 %v1436, 0.5
        %v1515 = vmul.f32 %v1438, 0.5
        %v1516 = vmul.f32 %v1440, 0.5
        %v1517 = vmul.f32 %v1442, 0.5
        %v1518 = vmul.f32 %v1446, 0.5
        %v1519 = vmul.f32 %v1448, 0.5
        %v1520 = vmul.f32 %v1450, 0.5
        %v1521 = vmul.f32 %v1452, 0.5
        %v1522 = vmul.f32 %v1456, 0.5
        %v1523 = vmul.f32 %v1458, 0.5
        %v1524 = vmul.f32 %v1460, 0.5
        %v1525 = vmul.f32 %v1462, 0.5
        %v1526 = vmul.f32 %v1466, 0.5
        %v1527 = vmul.f32 %v1468, 0.5
        %v1528 = vmul.f32 %v1470, 0.5
        %v1529 = vmul.f32 %v1472, 0.5
        %v1530 = vmul.f32 %v1476, 0.5
        %v1531 = vmul.f32 %v1478, 0.5
        %v1532 = vmul.f32 %v1480, 0.5
        %v1533 = vmul.f32 %v1482, 0.5
        %v1534 = vmul.f32 %v1486, 0.5
        %v1535 = vmul.f32 %v1488, 0.5
        %v1536 = vmul.f32 %v1490, 0.5
        %v1537 = vmul.f32 %v1492, 0.5
        %v1538 = vmul.f32 %v1496, 0.5
        %v1539 = vmul.f32 %v1498, 0.5
        %v1540 = vmul.f32 %v1500, 0.5
        %v1541 = vmul.f32 %v1502, 0.5
        %v1542 = vmul.f32 %v1506, 0.5
        %v1543 = vmul.f32 %v1508, 0.5
        %v1544 = vmul.f32 %v1510, 0.5
        %v1545 = vmul.f32 %v1512, 0.5
        %v1546 = vmul.f32 %v1514, 1.442695
        %v1547 = vpow.pop %v1546
        %v1548 = vmul.f32 %v1515, 1.442695
        %v1549 = vpow.pop %v1548
        %v1550 = vmul.f32 %v1516, 1.442695
        %v1551 = vpow.pop %v1550
        %v1552 = vmul.f32 %v1517, 1.442695
        %v1553 = vpow.pop %v1552
        %v1554 = vmul.f32 %v1518, 1.442695
        %v1555 = vpow.pop %v1554
        %v1556 = vmul.f32 %v1519, 1.442695
        %v1557 = vpow.pop %v1556
        %v1558 = vmul.f32 %v1520, 1.442695
        %v1559 = vpow.pop %v1558
        %v1560 = vmul.f32 %v1521, 1.442695
        %v1561 = vpow.pop %v1560
        %v1562 = vmul.f32 %v1522, 1.442695
        %v1563 = vpow.pop %v1562
        %v1564 = vmul.f32 %v1523, 1.442695
        %v1565 = vpow.pop %v1564
        %v1566 = vmul.f32 %v1524, 1.442695
        %v1567 = vpow.pop %v1566
        %v1568 = vmul.f32 %v1525, 1.442695
        %v1569 = vpow.pop %v1568
        %v1570 = vmul.f32 %v1526, 1.442695
        %v1571 = vpow.pop %v1570
        %v1572 = vmul.f32 %v1527, 1.442695
        %v1573 = vpow.pop %v1572
        %v1574 = vmul.f32 %v1528, 1.442695
        %v1575 = vpow.pop %v1574
        %v1576 = vmul.f32 %v1529, 1.442695
        %v1577 = vpow.pop %v1576
        %v1578 = vmul.f32 %v1530, 1.442695
        %v1579 = vpow.pop %v1578
        %v1580 = vmul.f32 %v1531, 1.442695
        %v1581 = vpow.pop %v1580
        %v1582 = vmul.f32 %v1532, 1.442695
        %v1583 = vpow.pop %v1582
        %v1584 = vmul.f32 %v1533, 1.442695
        %v1585 = vpow.pop %v1584
        %v1586 = vmul.f32 %v1534, 1.442695
        %v1587 = vpow.pop %v1586
        %v1588 = vmul.f32 %v1535, 1.442695
        %v1589 = vpow.pop %v1588
        %v1590 = vmul.f32 %v1536, 1.442695
        %v1591 = vpow.pop %v1590
        %v1592 = vmul.f32 %v1537, 1.442695
        %v1593 = vpow.pop %v1592
        %v1594 = vmul.f32 %v1538, 1.442695
        %v1595 = vpow.pop %v1594
        %v1596 = vmul.f32 %v1539, 1.442695
        %v1597 = vpow.pop %v1596
        %v1598 = vmul.f32 %v1540, 1.442695
        %v1599 = vpow.pop %v1598
        %v1600 = vmul.f32 %v1541, 1.442695
        %v1601 = vpow.pop %v1600
        %v1602 = vmul.f32 %v1542, 1.442695
        %v1603 = vpow.pop %v1602
        %v1604 = vmul.f32 %v1543, 1.442695
        %v1605 = vpow.pop %v1604
        %v1606 = vmul.f32 %v1544, 1.442695
        %v1607 = vpow.pop %v1606
        %v1608 = vmul.f32 %v1545, 1.442695
        %v1609 = vpow.pop %v1608
        %v1610 = vld [vmem:[%s390] sm:$0xff]
        %v1611 = vld [vmem:[%s390 + $0x8] sm:$0xff]
        %v1612 = vld [vmem:[%s390 + $0x10] sm:$0xff]
        %v1613 = vld [vmem:[%s390 + $0x18] sm:$0xff]
        %v1614 = vld [vmem:[%s390 + $0x20] sm:$0xff]
        %v1615 = vld [vmem:[%s390 + $0x28] sm:$0xff]
        %v1616 = vld [vmem:[%s390 + $0x30] sm:$0xff]
        %v1617 = vld [vmem:[%s390 + $0x38] sm:$0xff]
        %v1618 = vld [vmem:[%s390 + $0x40] sm:$0xff]
        %v1619 = vld [vmem:[%s390 + $0x48] sm:$0xff]
        %v1620 = vld [vmem:[%s390 + $0x50] sm:$0xff]
        %v1621 = vld [vmem:[%s390 + $0x58] sm:$0xff]
        %v1622 = vld [vmem:[%s390 + $0x60] sm:$0xff]
        %v1623 = vld [vmem:[%s390 + $0x68] sm:$0xff]
        %v1624 = vld [vmem:[%s390 + $0x70] sm:$0xff]
        %v1625 = vld [vmem:[%s390 + $0x78] sm:$0xff]
        %v1626 = vld [vmem:[%s390 + $0x80] sm:$0xff]
        %v1627 = vld [vmem:[%s390 + $0x88] sm:$0xff]
        %v1628 = vld [vmem:[%s390 + $0x90] sm:$0xff]
        %v1629 = vld [vmem:[%s390 + $0x98] sm:$0xff]
        %v1630 = vld [vmem:[%s390 + $0xa0] sm:$0xff]
        %v1631 = vld [vmem:[%s390 + $0xa8] sm:$0xff]
        %v1632 = vld [vmem:[%s390 + $0xb0] sm:$0xff]
        %v1633 = vld [vmem:[%s390 + $0xb8] sm:$0xff]
        %v1634 = vld [vmem:[%s390 + $0xc0] sm:$0xff]
        %v1635 = vld [vmem:[%s390 + $0xc8] sm:$0xff]
        %v1636 = vld [vmem:[%s390 + $0xd0] sm:$0xff]
        %v1637 = vld [vmem:[%s390 + $0xd8] sm:$0xff]
        %v1638 = vld [vmem:[%s390 + $0xe0] sm:$0xff]
        %v1639 = vld [vmem:[%s390 + $0xe8] sm:$0xff]
        %v1640 = vld [vmem:[%s390 + $0xf0] sm:$0xff]
        %v1641 = vld [vmem:[%s390 + $0xf8] sm:$0xff]
        %v1642 = vmul.f32 %v1610, %v1547
        %v1643 = vmul.f32 %v1611, %v1549
        %v1644 = vmul.f32 %v1612, %v1551
        %v1645 = vmul.f32 %v1613, %v1553
        %v1646 = vmul.f32 %v1614, %v1555
        %v1647 = vmul.f32 %v1615, %v1557
        %v1648 = vmul.f32 %v1616, %v1559
        %v1649 = vmul.f32 %v1617, %v1561
        %v1650 = vmul.f32 %v1618, %v1563
        %v1651 = vmul.f32 %v1619, %v1565
        %v1652 = vmul.f32 %v1620, %v1567
        %v1653 = vmul.f32 %v1621, %v1569
        %v1654 = vmul.f32 %v1622, %v1571
        %v1655 = vmul.f32 %v1623, %v1573
        %v1656 = vmul.f32 %v1624, %v1575
        %v1657 = vmul.f32 %v1625, %v1577
        %v1658 = vmul.f32 %v1626, %v1579
        %v1659 = vmul.f32 %v1627, %v1581
        %v1660 = vmul.f32 %v1628, %v1583
        %v1661 = vmul.f32 %v1629, %v1585
        %v1662 = vmul.f32 %v1630, %v1587
        %v1663 = vmul.f32 %v1631, %v1589
        %v1664 = vmul.f32 %v1632, %v1591
        %v1665 = vmul.f32 %v1633, %v1593
        %v1666 = vmul.f32 %v1634, %v1595
        %v1667 = vmul.f32 %v1635, %v1597
        %v1668 = vmul.f32 %v1636, %v1599
        %v1669 = vmul.f32 %v1637, %v1601
        %v1670 = vmul.f32 %v1638, %v1603
        %v1671 = vmul.f32 %v1639, %v1605
        %v1672 = vmul.f32 %v1640, %v1607
        %v1673 = vmul.f32 %v1641, %v1609
        %v1674 = vadd.f32 %v1642, %v1323
        %v1675 = vadd.f32 %v1643, %v1325
        %v1676 = vadd.f32 %v1644, %v1327
        %v1677 = vadd.f32 %v1645, %v1329
        %v1678 = vadd.f32 %v1646, %v1333
        %v1679 = vadd.f32 %v1647, %v1335
        %v1680 = vadd.f32 %v1648, %v1337
        %v1681 = vadd.f32 %v1649, %v1339
        %v1682 = vadd.f32 %v1650, %v1343
        %v1683 = vadd.f32 %v1651, %v1345
        %v1684 = vadd.f32 %v1652, %v1347
        %v1685 = vadd.f32 %v1653, %v1349
        %v1686 = vadd.f32 %v1654, %v1353
        %v1687 = vadd.f32 %v1655, %v1355
        %v1688 = vadd.f32 %v1656, %v1357
        %v1689 = vadd.f32 %v1657, %v1359
        %v1690 = vadd.f32 %v1658, %v1363
        %v1691 = vadd.f32 %v1659, %v1365
        %v1692 = vadd.f32 %v1660, %v1367
        %v1693 = vadd.f32 %v1661, %v1369
        %v1694 = vadd.f32 %v1662, %v1373
        %v1695 = vadd.f32 %v1663, %v1375
        %v1696 = vadd.f32 %v1664, %v1377
        %v1697 = vadd.f32 %v1665, %v1379
        %v1698 = vadd.f32 %v1666, %v1383
        %v1699 = vadd.f32 %v1667, %v1385
        %v1700 = vadd.f32 %v1668, %v1387
        %v1701 = vadd.f32 %v1669, %v1389
        %v1702 = vadd.f32 %v1670, %v1393
        %v1703 = vadd.f32 %v1671, %v1395
        %v1704 = vadd.f32 %v1672, %v1397
        %v1705 = vadd.f32 %v1673, %v1399
        %1706 = vst [vmem:[%s423] sm:$0xff] %v1323
        %1707 = vst [vmem:[%s423 + $0x8] sm:$0xff] %v1325
        %1708 = vst [vmem:[%s423 + $0x10] sm:$0xff] %v1327
        %1709 = vst [vmem:[%s423 + $0x18] sm:$0xff] %v1329
        %1710 = vst [vmem:[%s423 + $0x20] sm:$0xff] %v1333
        %1711 = vst [vmem:[%s423 + $0x28] sm:$0xff] %v1335
        %1712 = vst [vmem:[%s423 + $0x30] sm:$0xff] %v1337
        %1713 = vst [vmem:[%s423 + $0x38] sm:$0xff] %v1339
        %1714 = vst [vmem:[%s423 + $0x40] sm:$0xff] %v1343
        %1715 = vst [vmem:[%s423 + $0x48] sm:$0xff] %v1345
        %1716 = vst [vmem:[%s423 + $0x50] sm:$0xff] %v1347
        %1717 = vst [vmem:[%s423 + $0x58] sm:$0xff] %v1349
        %1718 = vst [vmem:[%s423 + $0x60] sm:$0xff] %v1353
        %1719 = vst [vmem:[%s423 + $0x68] sm:$0xff] %v1355
        %1720 = vst [vmem:[%s423 + $0x70] sm:$0xff] %v1357
        %1721 = vst [vmem:[%s423 + $0x78] sm:$0xff] %v1359
        %1722 = vst [vmem:[%s423 + $0x80] sm:$0xff] %v1363
        %1723 = vst [vmem:[%s423 + $0x88] sm:$0xff] %v1365
        %1724 = vst [vmem:[%s423 + $0x90] sm:$0xff] %v1367
        %1725 = vst [vmem:[%s423 + $0x98] sm:$0xff] %v1369
        %1726 = vst [vmem:[%s423 + $0xa0] sm:$0xff] %v1373
        %1727 = vst [vmem:[%s423 + $0xa8] sm:$0xff] %v1375
        %1728 = vst [vmem:[%s423 + $0xb0] sm:$0xff] %v1377
        %1729 = vst [vmem:[%s423 + $0xb8] sm:$0xff] %v1379
        %1730 = vst [vmem:[%s423 + $0xc0] sm:$0xff] %v1383
        %1731 = vst [vmem:[%s423 + $0xc8] sm:$0xff] %v1385
        %1732 = vst [vmem:[%s423 + $0xd0] sm:$0xff] %v1387
        %1733 = vst [vmem:[%s423 + $0xd8] sm:$0xff] %v1389
        %1734 = vst [vmem:[%s423 + $0xe0] sm:$0xff] %v1393
        %1735 = vst [vmem:[%s423 + $0xe8] sm:$0xff] %v1395
        %1736 = vst [vmem:[%s423 + $0xf0] sm:$0xff] %v1397
        %1737 = vst [vmem:[%s423 + $0xf8] sm:$0xff] %v1399
        %1738 = vst [vmem:[%s430] sm:$0xff] %v1436
        %1739 = vst [vmem:[%s430 + $0x8] sm:$0xff] %v1438
        %1740 = vst [vmem:[%s430 + $0x10] sm:$0xff] %v1440
        %1741 = vst [vmem:[%s430 + $0x18] sm:$0xff] %v1442
        %1742 = vst [vmem:[%s430 + $0x20] sm:$0xff] %v1446
        %1743 = vst [vmem:[%s430 + $0x28] sm:$0xff] %v1448
        %1744 = vst [vmem:[%s430 + $0x30] sm:$0xff] %v1450
        %1745 = vst [vmem:[%s430 + $0x38] sm:$0xff] %v1452
        %1746 = vst [vmem:[%s430 + $0x40] sm:$0xff] %v1456
        %1747 = vst [vmem:[%s430 + $0x48] sm:$0xff] %v1458
        %1748 = vst [vmem:[%s430 + $0x50] sm:$0xff] %v1460
        %1749 = vst [vmem:[%s430 + $0x58] sm:$0xff] %v1462
        %1750 = vst [vmem:[%s430 + $0x60] sm:$0xff] %v1466
        %1751 = vst [vmem:[%s430 + $0x68] sm:$0xff] %v1468
        %1752 = vst [vmem:[%s430 + $0x70] sm:$0xff] %v1470
        %1753 = vst [vmem:[%s430 + $0x78] sm:$0xff] %v1472
        %1754 = vst [vmem:[%s430 + $0x80] sm:$0xff] %v1476
        %1755 = vst [vmem:[%s430 + $0x88] sm:$0xff] %v1478
        %1756 = vst [vmem:[%s430 + $0x90] sm:$0xff] %v1480
        %1757 = vst [vmem:[%s430 + $0x98] sm:$0xff] %v1482
        %1758 = vst [vmem:[%s430 + $0xa0] sm:$0xff] %v1486
        %1759 = vst [vmem:[%s430 + $0xa8] sm:$0xff] %v1488
        %1760 = vst [vmem:[%s430 + $0xb0] sm:$0xff] %v1490
        %1761 = vst [vmem:[%s430 + $0xb8] sm:$0xff] %v1492
        %1762 = vst [vmem:[%s430 + $0xc0] sm:$0xff] %v1496
        %1763 = vst [vmem:[%s430 + $0xc8] sm:$0xff] %v1498
        %1764 = vst [vmem:[%s430 + $0xd0] sm:$0xff] %v1500
        %1765 = vst [vmem:[%s430 + $0xd8] sm:$0xff] %v1502
        %1766 = vst [vmem:[%s430 + $0xe0] sm:$0xff] %v1506
        %1767 = vst [vmem:[%s430 + $0xe8] sm:$0xff] %v1508
        %1768 = vst [vmem:[%s430 + $0xf0] sm:$0xff] %v1510
        %1769 = vst [vmem:[%s430 + $0xf8] sm:$0xff] %v1512
        %1770 = vst [vmem:[%s437] sm:$0xff] %v1674
        %1771 = vst [vmem:[%s437 + $0x8] sm:$0xff] %v1675
        %1772 = vst [vmem:[%s437 + $0x10] sm:$0xff] %v1676
        %1773 = vst [vmem:[%s437 + $0x18] sm:$0xff] %v1677
        %1774 = vst [vmem:[%s437 + $0x20] sm:$0xff] %v1678
        %1775 = vst [vmem:[%s437 + $0x28] sm:$0xff] %v1679
        %1776 = vst [vmem:[%s437 + $0x30] sm:$0xff] %v1680
        %1777 = vst [vmem:[%s437 + $0x38] sm:$0xff] %v1681
        %1778 = vst [vmem:[%s437 + $0x40] sm:$0xff] %v1682
        %1779 = vst [vmem:[%s437 + $0x48] sm:$0xff] %v1683
        %1780 = vst [vmem:[%s437 + $0x50] sm:$0xff] %v1684
        %1781 = vst [vmem:[%s437 + $0x58] sm:$0xff] %v1685
        %1782 = vst [vmem:[%s437 + $0x60] sm:$0xff] %v1686
        %1783 = vst [vmem:[%s437 + $0x68] sm:$0xff] %v1687
        %1784 = vst [vmem:[%s437 + $0x70] sm:$0xff] %v1688
        %1785 = vst [vmem:[%s437 + $0x78] sm:$0xff] %v1689
        %1786 = vst [vmem:[%s437 + $0x80] sm:$0xff] %v1690
        %1787 = vst [vmem:[%s437 + $0x88] sm:$0xff] %v1691
        %1788 = vst [vmem:[%s437 + $0x90] sm:$0xff] %v1692
        %1789 = vst [vmem:[%s437 + $0x98] sm:$0xff] %v1693
        %1790 = vst [vmem:[%s437 + $0xa0] sm:$0xff] %v1694
        %1791 = vst [vmem:[%s437 + $0xa8] sm:$0xff] %v1695
        %1792 = vst [vmem:[%s437 + $0xb0] sm:$0xff] %v1696
        %1793 = vst [vmem:[%s437 + $0xb8] sm:$0xff] %v1697
        %1794 = vst [vmem:[%s437 + $0xc0] sm:$0xff] %v1698
        %1795 = vst [vmem:[%s437 + $0xc8] sm:$0xff] %v1699
        %1796 = vst [vmem:[%s437 + $0xd0] sm:$0xff] %v1700
        %1797 = vst [vmem:[%s437 + $0xd8] sm:$0xff] %v1701
        %1798 = vst [vmem:[%s437 + $0xe0] sm:$0xff] %v1702
        %1799 = vst [vmem:[%s437 + $0xe8] sm:$0xff] %v1703
        %1800 = vst [vmem:[%s437 + $0xf0] sm:$0xff] %v1704
        %1801 = vst [vmem:[%s437 + $0xf8] sm:$0xff] %v1705
        %s1802 = sand.u32 %s178, 1
        %s1803 = scalar_lea.sflag [#allocation4], %s1802
        %s1804 = sand.u32 %s178, 1
        %s1805 = smul.addr %s1804, 256
        %s1806 = scalar_lea.vmem [#allocation13], %s1805
        %s1807 = sand.u32 %s34, 1
        %s1808 = scalar_lea.sflag [#allocation15], %s1807
        %s1809 = sand.u32 %s204, 1
        %s1810 = smul.addr %s1809, 256
        %s1811 = scalar_lea.vmem [#allocation14], %s1810
        %s1812 = sand.u32 %s34, 1
        %s1813 = scalar_lea.sflag [#allocation15], %s1812
        %s1814 = sand.u32 %s230, 1
        %s1815 = smul.addr %s1814, 256
        %s1816 = scalar_lea.vmem [#allocation16], %s1815
        // Predicated region
        $region69: #{vae_encoder_forward.1} parent=43 // pred_check
          %p1817 = pneg %p188
        $region70: #{vae_encoder_forward.1} parent=43 // pred_check_branch
          %1819 = sbr.rel (%p1817) target = $region72
        $region71: #{vae_encoder_forward.1} parent=43 // pred_region
          %s1820 = smul.u32 16, %s34
          %s1822 = ssub.s32 4096, 4096
          %1823 = vsyncadd %s1803, %s1822
          %s1824 = smul.addr %s1820, 2
          %s1825 = smul.addr %s1824, 128
          %s1826 = scalar_lea.hbm %s6, %s1825
          %s1827 = sshll.u32 %s1806, 4
          %s1828 = int_to_ptr.vmem [resolvable:$true] %s1827
          %1833 = dma.vmem_to_hbm [thread:$0]  %s1828, 4096, %s1826, %s1803, 256, 256, 16
        $region72: #{vae_encoder_forward.1} parent=43 // pred_fallthru
          _
        // Predicated region
        $region73: #{vae_encoder_forward.1} parent=43 // pred_check
          %p1834 = pneg %p214
        $region74: #{vae_encoder_forward.1} parent=43 // pred_check_branch
          %1836 = sbr.rel (%p1834) target = $region76
        $region75: #{vae_encoder_forward.1} parent=43 // pred_region
          %s1837 = smul.u32 16, %s34
          %s1839 = ssub.s32 4096, 4096
          %1840 = vsyncadd %s1808, %s1839
          %s1841 = smul.addr %s1837, 2
          %s1842 = smul.addr %s1841, 128
          %s1843 = scalar_lea.hbm %s7, %s1842
          %s1844 = sshll.u32 %s1811, 4
          %s1845 = int_to_ptr.vmem [resolvable:$true] %s1844
          %1850 = dma.vmem_to_hbm [thread:$0]  %s1845, 4096, %s1843, %s1808, 256, 256, 16
        $region76: #{vae_encoder_forward.1} parent=43 // pred_fallthru
          _
        // Predicated region
        $region77: #{vae_encoder_forward.1} parent=43 // pred_check
          %p1851 = pneg %p240
        $region78: #{vae_encoder_forward.1} parent=43 // pred_check_branch
          %1853 = sbr.rel (%p1851) target = $region80
        $region79: #{vae_encoder_forward.1} parent=43 // pred_region
          %s1854 = smul.u32 16, %s34
          %s1856 = ssub.s32 4096, 4096
          %1857 = vsyncadd %s1813, %s1856
          %s1858 = smul.addr %s1854, 2
          %s1859 = smul.addr %s1858, 128
          %s1860 = scalar_lea.hbm %s8, %s1859
          %s1861 = sshll.u32 %s1816, 4
          %s1862 = int_to_ptr.vmem [resolvable:$true] %s1861
          %1867 = dma.vmem_to_hbm [thread:$0]  %s1862, 4096, %s1860, %s1813, 256, 256, 16
        $region80: #{vae_encoder_forward.1} parent=43 // pred_fallthru
          _
      $region44: #{vae_encoder_forward.1} parent=5 // pred_fallthru
        _
      %p1868 = scmp.le.s32.totalorder 2, %s29
      // Predicated region
      $region81: #{vae_encoder_forward.1} parent=5 // pred_check
        %p1869 = pneg %p1868
      $region82: #{vae_encoder_forward.1} parent=5 // pred_check_branch
        %1871 = sbr.rel (%p1869) target = $region84
      $region83: #{vae_encoder_forward.1} parent=5 // pred_region
        %s1872 = ssub.s32 %s29, 2
        // Predicated region
        $region85: #{vae_encoder_forward.1} parent=83 // pred_check
          %p1873 = pneg %p194
        $region86: #{vae_encoder_forward.1} parent=83 // pred_check_branch
          %1875 = sbr.rel (%p1873) target = $region88
        $region87: #{vae_encoder_forward.1} parent=83 // pred_region
          %s1876 = sand.u32 %s179, 1
          %s1877 = scalar_lea.sflag [#allocation4], %s1876
          %s1878 = sand.u32 %s179, 1
          %s1879 = smul.addr %s1878, 256
          %s1880 = scalar_lea.vmem [#allocation13], %s1879
          %1881 = dma.done %s1877, 4096
        $region88: #{vae_encoder_forward.1} parent=83 // pred_fallthru
          _
        // Predicated region
        $region89: #{vae_encoder_forward.1} parent=83 // pred_check
          %p1882 = pneg %p220
        $region90: #{vae_encoder_forward.1} parent=83 // pred_check_branch
          %1884 = sbr.rel (%p1882) target = $region92
        $region91: #{vae_encoder_forward.1} parent=83 // pred_region
          %s1885 = sand.u32 %s35, 1
          %s1886 = scalar_lea.sflag [#allocation15], %s1885
          %s1887 = sand.u32 %s205, 1
          %s1888 = smul.addr %s1887, 256
          %s1889 = scalar_lea.vmem [#allocation14], %s1888
          %1890 = dma.done %s1886, 4096
        $region92: #{vae_encoder_forward.1} parent=83 // pred_fallthru
          _
        // Predicated region
        $region93: #{vae_encoder_forward.1} parent=83 // pred_check
          %p1891 = pneg %p246
        $region94: #{vae_encoder_forward.1} parent=83 // pred_check_branch
          %1893 = sbr.rel (%p1891) target = $region96
        $region95: #{vae_encoder_forward.1} parent=83 // pred_region
          %s1894 = sand.u32 %s35, 1
          %s1895 = scalar_lea.sflag [#allocation15], %s1894
          %s1896 = sand.u32 %s231, 1
          %s1897 = smul.addr %s1896, 256
          %s1898 = scalar_lea.vmem [#allocation16], %s1897
          %1899 = dma.done %s1895, 4096
        $region96: #{vae_encoder_forward.1} parent=83 // pred_fallthru
          _
      $region84: #{vae_encoder_forward.1} parent=5 // pred_fallthru
        _
    $region6: #{vae_encoder_forward.1} parent=1 // loop_footer
      %s33 = sadd.s32 1, %s29
    $region7: #{vae_encoder_forward.1} parent=1 // loop_footer_branch
      %28 = sbr.rel target = $region3
    $region8: #{vae_encoder_forward.1} parent=1 // loop_exit
      _
    %1900 = vsyncpa [#allocation3], 1
    %s1901 = scalar_lea.sflag [#allocation3], 1
    %1902 = vsyncpa %s1901, 1
    %1903 = vsyncpa [#allocation6], 1
    %1904 = vsyncpa [#allocation9], 1
    %1905 = vsyncpa [#allocation12], 1
    %s1906 = scalar_lea.sflag [#allocation12], 1
    %1907 = vsyncpa %s1906, 1
    %1908 = vsyncpa [#allocation4], 1
    %s1909 = scalar_lea.sflag [#allocation4], 1
    %1910 = vsyncpa %s1909, 1
    %1911 = vsyncpa [#allocation15], 1
    %s1912 = scalar_lea.sflag [#allocation15], 1
    %1913 = vsyncpa %s1912, 1

</llo_original>
